<compile_context>
chip_gen: v6e
topology: v6e:2x2x1
jax: 0.10.0
libtpu: 0.0.40
codegen_flags: <defaults>
</compile_context>

<pallas_src>
import functools

import jax
import jax.numpy as jnp
from jax.experimental import pallas as pl
from jax.experimental.pallas import tpu as pltpu


# ---------------------------------------------------------------------------
# Helpers
# ---------------------------------------------------------------------------
def _round_up(x, m):
    return ((x + m - 1) // m) * m


def _vmem_budget_bytes():
    """~75% of physical VMEM (v5e/v6e: 128 MiB, v7x: 64 MiB); safe fallback."""
    try:
        cap = int(pltpu.get_tpu_info().vmem_capacity_bytes)
    except Exception:
        cap = 64 << 20  # conservative (v7x physical)
    budget = cap * 3 // 4
    return max(32 << 20, min(budget, 112 << 20))


def _choose_tiles(n):
    """Pick (N_pad, tm, tk): row tile tm (<=512), neighbour tile tk (<=2048)."""
    n_pad = _round_up(n, 128)
    if n_pad <= 512:
        tm = n_pad
    elif n_pad % 512 == 0:
        tm = 512
    elif n_pad % 256 == 0:
        tm = 256
    else:
        tm = 128
    if n_pad <= 2048:
        tk = n_pad
    else:
        tk = 512
        for cand in (2048, 1024, 1536):
            if n_pad % cand == 0:
                tk = cand
                break
    return n_pad, tm, tk


def _vmem_footprint(n_pad, tm, tk, d_in_p, d_out_p, out_itemsize, resident):
    """Approximate double-buffered VMEM bytes for one sage_conv pallas_call."""
    b = 2 * tm * tk * 2                                     # A tile (bf16)
    b += (2 * n_pad * d_in_p * 2) if resident else (2 * tk * d_in_p * 2)  # xn
    b += 2 * tm * d_in_p * 2                                # xr (root rows)
    b += 2 * tm * 128 * 4                                   # inv_deg (lane-padded)
    b += 2 * 2 * d_in_p * d_out_p * 2                       # [W_l; W_r]
    b += 2 * 8 * d_out_p * 4                                # bias
    b += 2 * tm * d_out_p * out_itemsize                    # out tile
    b += tm * d_in_p * 4                                    # f32 accumulator
    b += 256 * (2 * d_in_p * 2 + 3 * d_out_p * 4)           # epilogue temporaries
    return b


# ---------------------------------------------------------------------------
# Pallas kernel: one SAGEConv layer
# ---------------------------------------------------------------------------
def _sage_layer_kernel(a_ref, xn_ref, xr_ref, invdeg_ref, wcat_ref, b_ref,
                       o_ref, acc_ref, *, xn_resident, tk, ep_rows,
                       apply_relu, apply_log_softmax, valid_out_dim):
    k = pl.program_id(1)

    @pl.when(k == 0)
    def _init():
        acc_ref[...] = jnp.zeros_like(acc_ref)

    # Neighbour-sum accumulation across K tiles (f32 accumulator).
    if xn_resident:
        start = pl.multiple_of(k * tk, tk)
        xn = xn_ref[pl.ds(start, tk), :]
    else:
        xn = xn_ref[...]
    acc_ref[...] += jnp.dot(a_ref[...], xn, preferred_element_type=jnp.float32)

    @pl.when(k == pl.num_programs(1) - 1)
    def _finalize():
        tm = acc_ref.shape[0]
        # Process the epilogue in row sub-chunks to bound vreg/VMEM pressure.
        for r0 in range(0, tm, ep_rows):
            r1 = r0 + ep_rows
            # Mean aggregation: scale the f32 sum by 1/deg in f32, then bf16.
            agg = (acc_ref[r0:r1, :] * invdeg_ref[r0:r1, :]).astype(wcat_ref.dtype)
            cat = jnp.concatenate([agg, xr_ref[r0:r1, :]], axis=1)
            out = (jnp.dot(cat, wcat_ref[...], preferred_element_type=jnp.float32)
                   + b_ref[...])
            if apply_relu:
                out = jnp.maximum(out, 0.0)
            if apply_log_softmax:
                # Mask padded logit columns so normalization covers output_dim only.
                col = jax.lax.broadcasted_iota(jnp.int32, out.shape, 1)
                masked = jnp.where(col < valid_out_dim, out, jnp.float32(-1e30))
                m = jnp.max(masked, axis=1, keepdims=True)
                s = masked - m
                lse = jnp.log(jnp.sum(jnp.exp(s), axis=1, keepdims=True))
                out = s - lse
            o_ref[r0:r1, :] = out.astype(o_ref.dtype)


# ---------------------------------------------------------------------------
# pallas_call wrapper (operates on padded arrays)
# ---------------------------------------------------------------------------
def sage_conv(a_pad, x_pad, invdeg_pad, wcat, bias, *, tm, tk, out_dtype,
              apply_relu, apply_log_softmax=False, valid_out_dim=None,
              vmem_budget=None):
    n_pad, d_in_p = x_pad.shape
    d_out_p = wcat.shape[1]
    if valid_out_dim is None:
        valid_out_dim = d_out_p
    if vmem_budget is None:
        vmem_budget = _vmem_budget_bytes()
    out_itemsize = jnp.dtype(out_dtype).itemsize

    # Shrink the neighbour tile if the streamed footprint exceeds the budget.
    while (tk > 512 and (tk // 2) % 128 == 0 and n_pad % (tk // 2) == 0
           and _vmem_footprint(n_pad, tm, tk, d_in_p, d_out_p, out_itemsize,
                               False) > vmem_budget):
        tk //= 2

    # Keep neighbour features fully VMEM-resident when they fit.
    xn_resident = (_vmem_footprint(n_pad, tm, tk, d_in_p, d_out_p, out_itemsize,
                                   True) <= vmem_budget)

    grid = (n_pad // tm, n_pad // tk)
    kernel = functools.partial(
        _sage_layer_kernel,
        xn_resident=xn_resident, tk=tk, ep_rows=min(tm, 256),
        apply_relu=apply_relu, apply_log_softmax=apply_log_softmax,
        valid_out_dim=valid_out_dim)

    if xn_resident:
        xn_spec = pl.BlockSpec((n_pad, d_in_p), lambda i, k: (0, 0))
    else:
        xn_spec = pl.BlockSpec((tk, d_in_p), lambda i, k: (k, 0))

    nbytes = lambda arr: int(arr.size) * arr.dtype.itemsize
    x_reads = 1 if xn_resident else (n_pad // tm)
    cost = pl.CostEstimate(
        flops=int(2 * n_pad * n_pad * d_in_p + 2 * n_pad * (2 * d_in_p) * d_out_p),
        transcendentals=int(n_pad * d_out_p) if apply_log_softmax else 0,
        bytes_accessed=int(nbytes(a_pad) + (x_reads + 1) * nbytes(x_pad)
                           + nbytes(invdeg_pad) + nbytes(wcat) + nbytes(bias)
                           + n_pad * d_out_p * out_itemsize),
    )

    return pl.pallas_call(
        kernel,
        out_shape=jax.ShapeDtypeStruct((n_pad, d_out_p), out_dtype),
        grid_spec=pltpu.PrefetchScalarGridSpec(
            num_scalar_prefetch=0,
            grid=grid,
            in_specs=[
                pl.BlockSpec((tm, tk), lambda i, k: (i, k)),        # A (counts)
                xn_spec,                                            # x (neighbours)
                pl.BlockSpec((tm, d_in_p), lambda i, k: (i, 0)),    # x (root rows)
                pl.BlockSpec((tm, 1), lambda i, k: (i, 0)),         # 1/deg (f32)
                pl.BlockSpec((2 * d_in_p, d_out_p), lambda i, k: (0, 0)),  # [W_l;W_r]
                pl.BlockSpec((1, d_out_p), lambda i, k: (0, 0)),    # bias (lin_l)
            ],
            out_specs=pl.BlockSpec((tm, d_out_p), lambda i, k: (i, 0)),
            scratch_shapes=[pltpu.VMEM((tm, d_in_p), jnp.float32)],
        ),
        compiler_params=pltpu.CompilerParams(
            dimension_semantics=("parallel", "arbitrary"),
            vmem_limit_bytes=int(vmem_budget),
        ),
        cost_estimate=cost,
    )(a_pad, x_pad, x_pad, invdeg_pad, wcat, bias)


# ---------------------------------------------------------------------------
# Model-level wrappers
# ---------------------------------------------------------------------------
def build_graph(edge_index, num_nodes):
    """Dense neighbour-count matrix + inverse degree (mean aggregation)."""
    src, dst = edge_index[0], edge_index[1]
    a_cnt = jnp.zeros((num_nodes, num_nodes), jnp.float32).at[dst, src].add(1.0)
    deg = jnp.sum(a_cnt, axis=1, keepdims=True)
    inv_deg = jnp.where(deg > 0, 1.0 / jnp.maximum(deg, 1.0), 0.0)
    return a_cnt, inv_deg


def init_graphsage_params(key, input_dim, hid_dim, output_dim, num_layers=2):
    """Per layer: (W_l(in,out), W_r(in,out), b_l(1,out)) — PyG SAGEConv style."""
    if num_layers > 1:
        dims = ([(input_dim, hid_dim)]
                + [(hid_dim, hid_dim)] * (num_layers - 2)
                + [(hid_dim, output_dim)])
    else:
        dims = [(input_dim, output_dim)]
    params = []
    for (d_in, d_out) in dims:
        key, k1, k2 = jax.random.split(key, 3)
        scale = 1.0 / jnp.sqrt(jnp.float32(d_in))
        w_l = jax.random.uniform(k1, (d_in, d_out), jnp.float32, -scale, scale)
        w_r = jax.random.uniform(k2, (d_in, d_out), jnp.float32, -scale, scale)
        b_l = jnp.zeros((1, d_out), jnp.float32)
        params.append((w_l, w_r, b_l))
    return params


def _pad_feats(x, n_pad):
    n, d = x.shape
    d_pad = _round_up(d, 128)
    return jnp.zeros((n_pad, d_pad), jnp.bfloat16).at[:n, :d].set(
        x.astype(jnp.bfloat16))


def _pad_graph(a_cnt, inv_deg, n_pad):
    n = a_cnt.shape[0]
    a_pad = jnp.zeros((n_pad, n_pad), jnp.bfloat16).at[:n, :n].set(
        a_cnt.astype(jnp.bfloat16))  # small integer counts: exact in bf16
    inv_pad = jnp.zeros((n_pad, 1), jnp.float32).at[:n, :].set(inv_deg)
    return a_pad, inv_pad


def _pack_layer(w_l, w_r, b_l):
    """Pad + fuse [W_l; W_r] so the epilogue is one full-depth MXU matmul."""
    d_in, d_out = w_l.shape
    d_in_p, d_out_p = _round_up(d_in, 128), _round_up(d_out, 128)
    wcat = jnp.zeros((2 * d_in_p, d_out_p), jnp.bfloat16)
    wcat = wcat.at[:d_in, :d_out].set(w_l.astype(jnp.bfloat16))
    wcat = wcat.at[d_in_p:d_in_p + d_in, :d_out].set(w_r.astype(jnp.bfloat16))
    bias = jnp.zeros((1, d_out_p), jnp.float32).at[:, :d_out].set(b_l)
    return wcat, bias


def graphsage_forward(params, x, edge_index):
    """Returns (hidden_x, log_softmax(out)) exactly as the PyTorch module does."""
    n = x.shape[0]
    n_pad, tm, tk = _choose_tiles(n)
    budget = _vmem_budget_bytes()

    a_cnt, inv_deg = build_graph(edge_index, n)
    a_pad, inv_pad = _pad_graph(a_cnt, inv_deg, n_pad)

    # Padded bf16 activations stay padded across layers (no HBM repack round trips).
    h_pad = _pad_feats(x, n_pad)
    hid_dim = None
    for (w_l, w_r, b_l) in params[:-1]:
        wcat, bias = _pack_layer(w_l, w_r, b_l)
        h_pad = sage_conv(a_pad, h_pad, inv_pad, wcat, bias,
                          tm=tm, tk=tk, out_dtype=jnp.bfloat16,
                          apply_relu=True, vmem_budget=budget)
        hid_dim = w_l.shape[1]
        # F.dropout(training=False) -> identity in eval mode.

    w_l, w_r, b_l = params[-1]
    wcat, bias = _pack_layer(w_l, w_r, b_l)
    log_probs_pad = sage_conv(a_pad, h_pad, inv_pad, wcat, bias,
                              tm=tm, tk=tk, out_dtype=jnp.float32,
                              apply_relu=False, apply_log_softmax=True,
                              valid_out_dim=w_l.shape[1], vmem_budget=budget)
    log_probs = log_probs_pad[:n, :w_l.shape[1]]

    hidden = x if hid_dim is None else h_pad[:n, :hid_dim].astype(jnp.float32)
    return hidden, log_probs


# ---------------------------------------------------------------------------
# Demo / smoke test
# ---------------------------------------------------------------------------
if __name__ == "__main__":
    key = jax.random.PRNGKey(0)

    num_nodes = 16
    input_dim, hid_dim, output_dim, num_layers = 16, 32, 8, 2

    k_x, k_e, k_p = jax.random.split(key, 3)
    x = jax.random.normal(k_x, (num_nodes, input_dim), jnp.float32)

    num_edges = 48
    edge_index = jax.random.randint(k_e, (2, num_edges), 0, num_nodes,
                                    dtype=jnp.int32)

    params = init_graphsage_params(k_p, input_dim, hid_dim, output_dim, num_layers)

    fwd = jax.jit(graphsage_forward)
    hidden, log_probs = fwd(params, x, edge_index)
    jax.block_until_ready((hidden, log_probs))

    assert hidden.shape == (num_nodes, hid_dim)
    assert log_probs.shape == (num_nodes, output_dim)

    # log_softmax rows must exponentiate-sum to 1
    row_sums = jnp.exp(log_probs).sum(axis=1)
    assert bool(jnp.allclose(row_sums, 1.0, atol=1e-3))

    # Pure-JAX f32 reference (bf16 kernel inputs/activations -> loose tolerance).
    a_cnt, inv_deg = build_graph(edge_index, num_nodes)
    a_mean = a_cnt * inv_deg

    def ref_forward(params, x, a):
        h = x
        for (w_l, w_r, b_l) in params[:-1]:
            h = jnp.maximum((a @ h) @ w_l + h @ w_r + b_l, 0.0)
        w_l, w_r, b_l = params[-1]
        out = (a @ h) @ w_l + h @ w_r + b_l
        return h, jax.nn.log_softmax(out, axis=1)

    ref_h, ref_lp = ref_forward(params, x, a_mean)
    assert bool(jnp.allclose(hidden, ref_h, atol=0.15, rtol=0.05))
    assert bool(jnp.allclose(log_probs, ref_lp, atol=0.15, rtol=0.05))

    print("KERNEL_OK")
</pallas_src>

<mosaic_0001>
module attributes {stable_mosaic.version = 11 : i64} {
  func.func private @main(%arg0: i32) attributes {dimension_semantics = [#tpu.dimension_semantics<core_parallel>], iteration_bounds = array<i64: 2>, tpu.core_type = #tpu.core_type<sc_scalar_subcore>, window_params = []} {
    return
  }
}

module attributes {stable_mosaic.version = 11 : i64} {
  func.func private @main(%arg0: i32) attributes {dimension_semantics = [#tpu.dimension_semantics<core_parallel>], iteration_bounds = array<i64: 2>, tpu.core_type = #tpu.core_type<sc_scalar_subcore>, window_params = []} {
    return
  }
}

module attributes {stable_mosaic.version = 11 : i64} {
  func.func @_sage_layer_kernel(%arg0: i32, %arg1: i32, %arg2: memref<128x128xbf16, #tpu.memory_space<vmem>>, %arg3: memref<128x128xbf16, #tpu.memory_space<vmem>>, %arg4: memref<128x128xbf16, #tpu.memory_space<vmem>>, %arg5: memref<128x1xf32, #tpu.memory_space<vmem>>, %arg6: memref<256x128xbf16, #tpu.memory_space<vmem>>, %arg7: memref<1x128xf32, #tpu.memory_space<vmem>>, %arg8: memref<128x128xbf16, #tpu.memory_space<vmem>>, %arg9: memref<128x128xf32, #tpu.memory_space<vmem>>) attributes {dimension_semantics = [#tpu.dimension_semantics<parallel>, #tpu.dimension_semantics<arbitrary>], iteration_bounds = array<i64: 1, 1>, scalar_prefetch = 0 : i64, scratch_operands = 1 : i64, tpu.core_type = #tpu.core_type<tc>, window_params = [{transform_indices = @transform_0, window_bounds = array<i64: 128, 128>}, {pipeline_mode = #tpu.pipeline_mode<synchronous>, transform_indices = @transform_1, window_bounds = array<i64: 128, 128>}, {transform_indices = @transform_2, window_bounds = array<i64: 128, 128>}, {transform_indices = @transform_3, window_bounds = array<i64: 128, 1>}, {pipeline_mode = #tpu.pipeline_mode<synchronous>, transform_indices = @transform_4, window_bounds = array<i64: 256, 128>}, {pipeline_mode = #tpu.pipeline_mode<synchronous>, transform_indices = @transform_5, window_bounds = array<i64: 1, 128>}, {transform_indices = @transform_6, window_bounds = array<i64: 128, 128>}]} {
    %c0_i32 = arith.constant 0 : i32
    %0 = arith.cmpi eq, %arg1, %c0_i32 : i32
    %1 = arith.extui %0 : i1 to i32
    %c0_i32_0 = arith.constant 0 : i32
    %2 = arith.cmpi ne, %1, %c0_i32_0 : i32
    scf.if %2 {
      %cst_9 = arith.constant 0.000000e+00 : f32
      %15 = vector.broadcast %cst_9 : f32 to vector<128x128xf32>
      %c0_10 = arith.constant 0 : index
      %c0_11 = arith.constant 0 : index
      %16 = vector.load %arg9[%c0_10, %c0_11] : memref<128x128xf32, #tpu.memory_space<vmem>>, vector<128x128xf32>
      tpu.vector_store %arg9[%c0_10, %c0_11], %15 {strides = array<i32>} : memref<128x128xf32, #tpu.memory_space<vmem>>, vector<128x128xf32>,
    } else {
    }
    %c128_i32 = arith.constant 128 : i32
    %3 = arith.muli %arg1, %c128_i32 : i32
    %4 = tpu.assume_multiple %3, 128 : i32
    %5 = arith.index_cast %4 : i32 to index
    %c0 = arith.constant 0 : index
    %6 = vector.load %arg3[%5, %c0] : memref<128x128xbf16, #tpu.memory_space<vmem>>, vector<128x128xbf16>
    %c0_1 = arith.constant 0 : index
    %c0_2 = arith.constant 0 : index
    %7 = vector.load %arg9[%c0_1, %c0_2] : memref<128x128xf32, #tpu.memory_space<vmem>>, vector<128x128xf32>
    %c0_3 = arith.constant 0 : index
    %c0_4 = arith.constant 0 : index
    %8 = vector.load %arg2[%c0_3, %c0_4] : memref<128x128xbf16, #tpu.memory_space<vmem>>, vector<128x128xbf16>
    %cst = arith.constant dense<0.000000e+00> : vector<128x128xf32>
    %9 = tpu.matmul %8, %6, %cst {dimension_numbers = #tpu.dot_dimension_numbers<[1], [0], [0], [1], [0, 0, 1, 1], [], []>} : vector<128x128xbf16>, vector<128x128xbf16>, vector<128x128xf32> -> vector<128x128xf32>
    %10 = arith.addf %7, %9 : vector<128x128xf32>
    %c0_5 = arith.constant 0 : index
    %c0_6 = arith.constant 0 : index
    %11 = vector.load %arg9[%c0_5, %c0_6] : memref<128x128xf32, #tpu.memory_space<vmem>>, vector<128x128xf32>
    tpu.vector_store %arg9[%c0_5, %c0_6], %10 {strides = array<i32>} : memref<128x128xf32, #tpu.memory_space<vmem>>, vector<128x128xf32>,
    %c0_i32_7 = arith.constant 0 : i32
    %12 = arith.cmpi eq, %arg1, %c0_i32_7 : i32
    %13 = arith.extui %12 : i1 to i32
    %c0_i32_8 = arith.constant 0 : i32
    %14 = arith.cmpi ne, %13, %c0_i32_8 : i32
    scf.if %14 {
      %c0_9 = arith.constant 0 : index
      %c0_10 = arith.constant 0 : index
      %15 = vector.load %arg9[%c0_9, %c0_10] : memref<128x128xf32, #tpu.memory_space<vmem>>, vector<128x128xf32>
      %c0_11 = arith.constant 0 : index
      %c0_12 = arith.constant 0 : index
      %16 = vector.load %arg5[%c0_11, %c0_12] : memref<128x1xf32, #tpu.memory_space<vmem>>, vector<128x1xf32>
      %17 = vector.broadcast %16 : vector<128x1xf32> to vector<128x128xf32>
      %18 = arith.mulf %15, %17 : vector<128x128xf32>
      %19 = arith.truncf %18 : vector<128x128xf32> to vector<128x128xbf16>
      %c0_13 = arith.constant 0 : index
      %c0_14 = arith.constant 0 : index
      %20 = vector.load %arg4[%c0_13, %c0_14] : memref<128x128xbf16, #tpu.memory_space<vmem>>, vector<128x128xbf16>
      %21 = tpu.concatenate %19, %20 in 1 : vector<128x128xbf16>, vector<128x128xbf16> -> vector<128x256xbf16>
      %c0_15 = arith.constant 0 : index
      %c0_16 = arith.constant 0 : index
      %22 = vector.load %arg6[%c0_15, %c0_16] : memref<256x128xbf16, #tpu.memory_space<vmem>>, vector<256x128xbf16>
      %cst_17 = arith.constant dense<0.000000e+00> : vector<128x128xf32>
      %23 = tpu.matmul %21, %22, %cst_17 {dimension_numbers = #tpu.dot_dimension_numbers<[1], [0], [0], [1], [0, 0, 1, 1], [], []>} : vector<128x256xbf16>, vector<256x128xbf16>, vector<128x128xf32> -> vector<128x128xf32>
      %c0_18 = arith.constant 0 : index
      %c0_19 = arith.constant 0 : index
      %24 = vector.load %arg7[%c0_18, %c0_19] : memref<1x128xf32, #tpu.memory_space<vmem>>, vector<1x128xf32>
      %25 = vector.broadcast %24 : vector<1x128xf32> to vector<128x128xf32>
      %26 = arith.addf %23, %25 : vector<128x128xf32>
      %cst_20 = arith.constant 0.000000e+00 : f32
      %27 = vector.broadcast %cst_20 : f32 to vector<128x128xf32>
      %28 = arith.maximumf %26, %27 : vector<128x128xf32>
      %29 = arith.truncf %28 : vector<128x128xf32> to vector<128x128xbf16>
      %c0_21 = arith.constant 0 : index
      %c0_22 = arith.constant 0 : index
      %30 = vector.load %arg8[%c0_21, %c0_22] : memref<128x128xbf16, #tpu.memory_space<vmem>>, vector<128x128xbf16>
      tpu.vector_store %arg8[%c0_21, %c0_22], %29 {strides = array<i32>} : memref<128x128xbf16, #tpu.memory_space<vmem>>, vector<128x128xbf16>,
    } else {
    }
    return
  }
  func.func @transform_0(%arg0: i32, %arg1: i32) -> (i32, i32) {
    %c0_i32 = arith.constant 0 : i32
    return %arg0, %arg1 : i32, i32
  }
  func.func @transform_1(%arg0: i32, %arg1: i32) -> (i32, i32) {
    %c0_i32 = arith.constant 0 : i32
    %c0_i32_0 = arith.constant 0 : i32
    %c0_i32_1 = arith.constant 0 : i32
    return %c0_i32, %c0_i32_0 : i32, i32
  }
  func.func @transform_2(%arg0: i32, %arg1: i32) -> (i32, i32) {
    %c0_i32 = arith.constant 0 : i32
    %c0_i32_0 = arith.constant 0 : i32
    return %arg0, %c0_i32 : i32, i32
  }
  func.func @transform_3(%arg0: i32, %arg1: i32) -> (i32, i32) {
    %c0_i32 = arith.constant 0 : i32
    %c0_i32_0 = arith.constant 0 : i32
    return %arg0, %c0_i32 : i32, i32
  }
  func.func @transform_4(%arg0: i32, %arg1: i32) -> (i32, i32) {
    %c0_i32 = arith.constant 0 : i32
    %c0_i32_0 = arith.constant 0 : i32
    %c0_i32_1 = arith.constant 0 : i32
    return %c0_i32, %c0_i32_0 : i32, i32
  }
  func.func @transform_5(%arg0: i32, %arg1: i32) -> (i32, i32) {
    %c0_i32 = arith.constant 0 : i32
    %c0_i32_0 = arith.constant 0 : i32
    %c0_i32_1 = arith.constant 0 : i32
    return %c0_i32, %c0_i32_0 : i32, i32
  }
  func.func @transform_6(%arg0: i32, %arg1: i32) -> (i32, i32) {
    %c0_i32 = arith.constant 0 : i32
    %c0_i32_0 = arith.constant 0 : i32
    return %arg0, %c0_i32 : i32, i32
  }
}

module attributes {stable_mosaic.version = 11 : i64} {
  func.func @_sage_layer_kernel(%arg0: i32, %arg1: i32, %arg2: memref<128x128xbf16, #tpu.memory_space<vmem>>, %arg3: memref<128x128xbf16, #tpu.memory_space<vmem>>, %arg4: memref<128x128xbf16, #tpu.memory_space<vmem>>, %arg5: memref<128x1xf32, #tpu.memory_space<vmem>>, %arg6: memref<256x128xbf16, #tpu.memory_space<vmem>>, %arg7: memref<1x128xf32, #tpu.memory_space<vmem>>, %arg8: memref<128x128xf32, #tpu.memory_space<vmem>>, %arg9: memref<128x128xf32, #tpu.memory_space<vmem>>) attributes {dimension_semantics = [#tpu.dimension_semantics<parallel>, #tpu.dimension_semantics<arbitrary>], iteration_bounds = array<i64: 1, 1>, scalar_prefetch = 0 : i64, scratch_operands = 1 : i64, tpu.core_type = #tpu.core_type<tc>, window_params = [{transform_indices = @transform_0, window_bounds = array<i64: 128, 128>}, {pipeline_mode = #tpu.pipeline_mode<synchronous>, transform_indices = @transform_1, window_bounds = array<i64: 128, 128>}, {transform_indices = @transform_2, window_bounds = array<i64: 128, 128>}, {transform_indices = @transform_3, window_bounds = array<i64: 128, 1>}, {pipeline_mode = #tpu.pipeline_mode<synchronous>, transform_indices = @transform_4, window_bounds = array<i64: 256, 128>}, {pipeline_mode = #tpu.pipeline_mode<synchronous>, transform_indices = @transform_5, window_bounds = array<i64: 1, 128>}, {transform_indices = @transform_6, window_bounds = array<i64: 128, 128>}]} {
    %c0_i32 = arith.constant 0 : i32
    %0 = arith.cmpi eq, %arg1, %c0_i32 : i32
    %1 = arith.extui %0 : i1 to i32
    %c0_i32_0 = arith.constant 0 : i32
    %2 = arith.cmpi ne, %1, %c0_i32_0 : i32
    scf.if %2 {
      %cst_9 = arith.constant 0.000000e+00 : f32
      %15 = vector.broadcast %cst_9 : f32 to vector<128x128xf32>
      %c0_10 = arith.constant 0 : index
      %c0_11 = arith.constant 0 : index
      %16 = vector.load %arg9[%c0_10, %c0_11] : memref<128x128xf32, #tpu.memory_space<vmem>>, vector<128x128xf32>
      tpu.vector_store %arg9[%c0_10, %c0_11], %15 {strides = array<i32>} : memref<128x128xf32, #tpu.memory_space<vmem>>, vector<128x128xf32>,
    } else {
    }
    %c128_i32 = arith.constant 128 : i32
    %3 = arith.muli %arg1, %c128_i32 : i32
    %4 = tpu.assume_multiple %3, 128 : i32
    %5 = arith.index_cast %4 : i32 to index
    %c0 = arith.constant 0 : index
    %6 = vector.load %arg3[%5, %c0] : memref<128x128xbf16, #tpu.memory_space<vmem>>, vector<128x128xbf16>
    %c0_1 = arith.constant 0 : index
    %c0_2 = arith.constant 0 : index
    %7 = vector.load %arg9[%c0_1, %c0_2] : memref<128x128xf32, #tpu.memory_space<vmem>>, vector<128x128xf32>
    %c0_3 = arith.constant 0 : index
    %c0_4 = arith.constant 0 : index
    %8 = vector.load %arg2[%c0_3, %c0_4] : memref<128x128xbf16, #tpu.memory_space<vmem>>, vector<128x128xbf16>
    %cst = arith.constant dense<0.000000e+00> : vector<128x128xf32>
    %9 = tpu.matmul %8, %6, %cst {dimension_numbers = #tpu.dot_dimension_numbers<[1], [0], [0], [1], [0, 0, 1, 1], [], []>} : vector<128x128xbf16>, vector<128x128xbf16>, vector<128x128xf32> -> vector<128x128xf32>
    %10 = arith.addf %7, %9 : vector<128x128xf32>
    %c0_5 = arith.constant 0 : index
    %c0_6 = arith.constant 0 : index
    %11 = vector.load %arg9[%c0_5, %c0_6] : memref<128x128xf32, #tpu.memory_space<vmem>>, vector<128x128xf32>
    tpu.vector_store %arg9[%c0_5, %c0_6], %10 {strides = array<i32>} : memref<128x128xf32, #tpu.memory_space<vmem>>, vector<128x128xf32>,
    %c0_i32_7 = arith.constant 0 : i32
    %12 = arith.cmpi eq, %arg1, %c0_i32_7 : i32
    %13 = arith.extui %12 : i1 to i32
    %c0_i32_8 = arith.constant 0 : i32
    %14 = arith.cmpi ne, %13, %c0_i32_8 : i32
    scf.if %14 {
      %c0_9 = arith.constant 0 : index
      %c0_10 = arith.constant 0 : index
      %15 = vector.load %arg9[%c0_9, %c0_10] : memref<128x128xf32, #tpu.memory_space<vmem>>, vector<128x128xf32>
      %c0_11 = arith.constant 0 : index
      %c0_12 = arith.constant 0 : index
      %16 = vector.load %arg5[%c0_11, %c0_12] : memref<128x1xf32, #tpu.memory_space<vmem>>, vector<128x1xf32>
      %17 = vector.broadcast %16 : vector<128x1xf32> to vector<128x128xf32>
      %18 = arith.mulf %15, %17 : vector<128x128xf32>
      %19 = arith.truncf %18 : vector<128x128xf32> to vector<128x128xbf16>
      %c0_13 = arith.constant 0 : index
      %c0_14 = arith.constant 0 : index
      %20 = vector.load %arg4[%c0_13, %c0_14] : memref<128x128xbf16, #tpu.memory_space<vmem>>, vector<128x128xbf16>
      %21 = tpu.concatenate %19, %20 in 1 : vector<128x128xbf16>, vector<128x128xbf16> -> vector<128x256xbf16>
      %c0_15 = arith.constant 0 : index
      %c0_16 = arith.constant 0 : index
      %22 = vector.load %arg6[%c0_15, %c0_16] : memref<256x128xbf16, #tpu.memory_space<vmem>>, vector<256x128xbf16>
      %cst_17 = arith.constant dense<0.000000e+00> : vector<128x128xf32>
      %23 = tpu.matmul %21, %22, %cst_17 {dimension_numbers = #tpu.dot_dimension_numbers<[1], [0], [0], [1], [0, 0, 1, 1], [], []>} : vector<128x256xbf16>, vector<256x128xbf16>, vector<128x128xf32> -> vector<128x128xf32>
      %c0_18 = arith.constant 0 : index
      %c0_19 = arith.constant 0 : index
      %24 = vector.load %arg7[%c0_18, %c0_19] : memref<1x128xf32, #tpu.memory_space<vmem>>, vector<1x128xf32>
      %25 = vector.broadcast %24 : vector<1x128xf32> to vector<128x128xf32>
      %26 = arith.addf %23, %25 : vector<128x128xf32>
      %27 = tpu.iota {dimensions = array<i32: 1>} : vector<128x128xi32>
      %c8_i32 = arith.constant 8 : i32
      %28 = vector.broadcast %c8_i32 : i32 to vector<128x128xi32>
      %29 = arith.cmpi slt, %27, %28 : vector<128x128xi32>
      %cst_20 = arith.constant -1.000000e+30 : f32
      %30 = vector.broadcast %cst_20 : f32 to vector<128x128xf32>
      %31 = arith.select %29, %26, %30 : vector<128x128xi1>, vector<128x128xf32>
      %cst_21 = arith.constant dense<0xFF800000> : vector<128xf32>
      %32 = vector.multi_reduction <maximumf>, %31, %cst_21 [1] : vector<128x128xf32> to vector<128xf32>
      %33 = vector.shape_cast %32 : vector<128xf32> to vector<128x1xf32>
      %34 = vector.broadcast %33 : vector<128x1xf32> to vector<128x128xf32>
      %35 = arith.subf %31, %34 : vector<128x128xf32>
      %36 = math.exp %35 : vector<128x128xf32>
      %cst_22 = arith.constant dense<0.000000e+00> : vector<128xf32>
      %37 = vector.multi_reduction <add>, %36, %cst_22 [1] : vector<128x128xf32> to vector<128xf32>
      %38 = vector.shape_cast %37 : vector<128xf32> to vector<128x1xf32>
      %39 = math.log %38 : vector<128x1xf32>
      %40 = vector.broadcast %39 : vector<128x1xf32> to vector<128x128xf32>
      %41 = arith.subf %35, %40 : vector<128x128xf32>
      %c0_23 = arith.constant 0 : index
      %c0_24 = arith.constant 0 : index
      %42 = vector.load %arg8[%c0_23, %c0_24] : memref<128x128xf32, #tpu.memory_space<vmem>>, vector<128x128xf32>
      tpu.vector_store %arg8[%c0_23, %c0_24], %41 {strides = array<i32>} : memref<128x128xf32, #tpu.memory_space<vmem>>, vector<128x128xf32>,
    } else {
    }
    return
  }
  func.func @transform_0(%arg0: i32, %arg1: i32) -> (i32, i32) {
    %c0_i32 = arith.constant 0 : i32
    return %arg0, %arg1 : i32, i32
  }
  func.func @transform_1(%arg0: i32, %arg1: i32) -> (i32, i32) {
    %c0_i32 = arith.constant 0 : i32
    %c0_i32_0 = arith.constant 0 : i32
    %c0_i32_1 = arith.constant 0 : i32
    return %c0_i32, %c0_i32_0 : i32, i32
  }
  func.func @transform_2(%arg0: i32, %arg1: i32) -> (i32, i32) {
    %c0_i32 = arith.constant 0 : i32
    %c0_i32_0 = arith.constant 0 : i32
    return %arg0, %c0_i32 : i32, i32
  }
  func.func @transform_3(%arg0: i32, %arg1: i32) -> (i32, i32) {
    %c0_i32 = arith.constant 0 : i32
    %c0_i32_0 = arith.constant 0 : i32
    return %arg0, %c0_i32 : i32, i32
  }
  func.func @transform_4(%arg0: i32, %arg1: i32) -> (i32, i32) {
    %c0_i32 = arith.constant 0 : i32
    %c0_i32_0 = arith.constant 0 : i32
    %c0_i32_1 = arith.constant 0 : i32
    return %c0_i32, %c0_i32_0 : i32, i32
  }
  func.func @transform_5(%arg0: i32, %arg1: i32) -> (i32, i32) {
    %c0_i32 = arith.constant 0 : i32
    %c0_i32_0 = arith.constant 0 : i32
    %c0_i32_1 = arith.constant 0 : i32
    return %c0_i32, %c0_i32_0 : i32, i32
  }
  func.func @transform_6(%arg0: i32, %arg1: i32) -> (i32, i32) {
    %c0_i32 = arith.constant 0 : i32
    %c0_i32_0 = arith.constant 0 : i32
    return %arg0, %c0_i32 : i32, i32
  }
}

</mosaic_0001>

<llo_original>
// kernel: graphsage_forward.2
$region0: #{graphsage_forward.2}
  #allocation0 [shape = 'u32[]', space=smem, size = 0x4, offset = 0x4, fixed_abs, tag = 'smem constant byte address 0x4 - core index']
  #allocation1 [shape = 'u32[144,128]{1,0:T(1,128)}', space=vmem, size = 0x12000, scoped, tag = 'internal scratch']
  #allocation2 [shape = 'f32[128,128]{1,0:T(8,128)}', space=vmem, size = 0x10000, scoped, tag = 'scratch operand']
  %s0 = inlined_call_operand.vmem [shape: bf16[128,128], index: 0, kind: input, shape index: {}]
  %s1 = inlined_call_operand.vmem [shape: bf16[128,128], index: 1, kind: input, shape index: {}, may-alias: {1,2}]
  %s2 = inlined_call_operand.vmem [shape: bf16[128,128], index: 2, kind: input, shape index: {}, may-alias: {1,2}]
  %s3 = inlined_call_operand.vmem [shape: f32[128,1], index: 3, kind: input, shape index: {}]
  %s4 = inlined_call_operand.vmem [shape: bf16[256,128], index: 4, kind: input, shape index: {}]
  %s5 = inlined_call_operand.vmem [shape: f32[1,128], index: 5, kind: input, shape index: {}]
  %s6 = inlined_call_operand.vmem [shape: bf16[128,128], index: 6, kind: output, shape index: {}]
  %s7 = sld [smem:[#allocation0]]
  $region42: #{graphsage_forward.2} parent=0
    _
  %s9 = ssub.s32 1, %s7
  %s10 = scalar_select 0, %s9, %s7
  // Predicated region
  $region2: #{graphsage_forward.2} parent=0 // pred_check
    _
  $region3: #{graphsage_forward.2} parent=0 // pred_check_branch
    %12 = sbr.rel (0) target = $region5
  $region4: #{graphsage_forward.2} parent=0 // pred_region
    _
  $region5: #{graphsage_forward.2} parent=0 // pred_fallthru
    _
  // Predicated region
  $region6: #{graphsage_forward.2} parent=0 // pred_check
    _
  $region7: #{graphsage_forward.2} parent=0 // pred_check_branch
    %14 = sbr.rel (0) target = $region9
  $region8: #{graphsage_forward.2} parent=0 // pred_region
    _
  $region9: #{graphsage_forward.2} parent=0 // pred_fallthru
    _
  // Predicated region
  $region10: #{graphsage_forward.2} parent=0 // pred_check
    _
  $region11: #{graphsage_forward.2} parent=0 // pred_check_branch
    %16 = sbr.rel (0) target = $region13
  $region12: #{graphsage_forward.2} parent=0 // pred_region
    _
  $region13: #{graphsage_forward.2} parent=0 // pred_fallthru
    _
  // Predicated region
  $region14: #{graphsage_forward.2} parent=0 // pred_check
    _
  $region15: #{graphsage_forward.2} parent=0 // pred_check_branch
    %18 = sbr.rel (0) target = $region17
  $region16: #{graphsage_forward.2} parent=0 // pred_region
    _
  $region17: #{graphsage_forward.2} parent=0 // pred_fallthru
    _
  // Predicated region
  $region18: #{graphsage_forward.2} parent=0 // pred_check
    _
  $region19: #{graphsage_forward.2} parent=0 // pred_check_branch
    %20 = sbr.rel (0) target = $region21
  $region20: #{graphsage_forward.2} parent=0 // pred_region
    _
  $region21: #{graphsage_forward.2} parent=0 // pred_fallthru
    _
  // Predicated region
  $region22: #{graphsage_forward.2} parent=0 // pred_check
    _
  $region23: #{graphsage_forward.2} parent=0 // pred_check_branch
    %22 = sbr.rel (0) target = $region25
  $region24: #{graphsage_forward.2} parent=0 // pred_region
    _
  $region25: #{graphsage_forward.2} parent=0 // pred_fallthru
    _
  %p24 = scmp.eq.s32.totalorder 0, 0
  // Predicated region
  $region26: #{graphsage_forward.2} parent=0 // pred_check
    %p25 = pneg %p24
  $region27: #{graphsage_forward.2} parent=0 // pred_check_branch
    %27 = sbr.rel (%p25) target = $region29
  $region28: #{graphsage_forward.2} parent=0 // pred_region
    %28 = vst [vmem:[#allocation2] sm:$0xff] 0.0
    %29 = vst [vmem:[#allocation2 + $0x8] sm:$0xff] 0.0
    %30 = vst [vmem:[#allocation2 + $0x10] sm:$0xff] 0.0
    %31 = vst [vmem:[#allocation2 + $0x18] sm:$0xff] 0.0
    %32 = vst [vmem:[#allocation2 + $0x20] sm:$0xff] 0.0
    %33 = vst [vmem:[#allocation2 + $0x28] sm:$0xff] 0.0
    %34 = vst [vmem:[#allocation2 + $0x30] sm:$0xff] 0.0
    %35 = vst [vmem:[#allocation2 + $0x38] sm:$0xff] 0.0
    %36 = vst [vmem:[#allocation2 + $0x40] sm:$0xff] 0.0
    %37 = vst [vmem:[#allocation2 + $0x48] sm:$0xff] 0.0
    %38 = vst [vmem:[#allocation2 + $0x50] sm:$0xff] 0.0
    %39 = vst [vmem:[#allocation2 + $0x58] sm:$0xff] 0.0
    %40 = vst [vmem:[#allocation2 + $0x60] sm:$0xff] 0.0
    %41 = vst [vmem:[#allocation2 + $0x68] sm:$0xff] 0.0
    %42 = vst [vmem:[#allocation2 + $0x70] sm:$0xff] 0.0
    %43 = vst [vmem:[#allocation2 + $0x78] sm:$0xff] 0.0
  $region29: #{graphsage_forward.2} parent=0 // pred_fallthru
    _
  %s44 = smul.u32 0, 128
  %s45 = sshra.s32 %s44, 3
  %s46 = sand.u32 %s44, 7
  %s47 = smul.addr %s45, 4
  %s48 = scalar_lea.vmem %s1, %s47
  %v49 = vld [vmem:[%s48] sm:$0xf]
  %v50 = vld [vmem:[%s48 + $0x4] sm:$0xf]
  %v51 = vld [vmem:[%s48 + $0x8] sm:$0xf]
  %v52 = vld [vmem:[%s48 + $0xc] sm:$0xf]
  %v53 = vld [vmem:[%s48 + $0x10] sm:$0xf]
  %v54 = vld [vmem:[%s48 + $0x14] sm:$0xf]
  %v55 = vld [vmem:[%s48 + $0x18] sm:$0xf]
  %v56 = vld [vmem:[%s48 + $0x1c] sm:$0xf]
  %v57 = vld [vmem:[%s48 + $0x20] sm:$0xf]
  %v58 = vld [vmem:[%s48 + $0x24] sm:$0xf]
  %v59 = vld [vmem:[%s48 + $0x28] sm:$0xf]
  %v60 = vld [vmem:[%s48 + $0x2c] sm:$0xf]
  %v61 = vld [vmem:[%s48 + $0x30] sm:$0xf]
  %v62 = vld [vmem:[%s48 + $0x34] sm:$0xf]
  %v63 = vld [vmem:[%s48 + $0x38] sm:$0xf]
  %v64 = vld [vmem:[%s48 + $0x3c] sm:$0xf]
  %v65 = vld [vmem:[#allocation2] sm:$0xff]
  %v66 = vld [vmem:[#allocation2 + $0x8] sm:$0xff]
  %v67 = vld [vmem:[#allocation2 + $0x10] sm:$0xff]
  %v68 = vld [vmem:[#allocation2 + $0x18] sm:$0xff]
  %v69 = vld [vmem:[#allocation2 + $0x20] sm:$0xff]
  %v70 = vld [vmem:[#allocation2 + $0x28] sm:$0xff]
  %v71 = vld [vmem:[#allocation2 + $0x30] sm:$0xff]
  %v72 = vld [vmem:[#allocation2 + $0x38] sm:$0xff]
  %v73 = vld [vmem:[#allocation2 + $0x40] sm:$0xff]
  %v74 = vld [vmem:[#allocation2 + $0x48] sm:$0xff]
  %v75 = vld [vmem:[#allocation2 + $0x50] sm:$0xff]
  %v76 = vld [vmem:[#allocation2 + $0x58] sm:$0xff]
  %v77 = vld [vmem:[#allocation2 + $0x60] sm:$0xff]
  %v78 = vld [vmem:[#allocation2 + $0x68] sm:$0xff]
  %v79 = vld [vmem:[#allocation2 + $0x70] sm:$0xff]
  %v80 = vld [vmem:[#allocation2 + $0x78] sm:$0xff]
  %v81 = vld [vmem:[%s0] sm:$0xf]
  %v82 = vld [vmem:[%s0 + $0x4] sm:$0xf]
  %v83 = vld [vmem:[%s0 + $0x8] sm:$0xf]
  %v84 = vld [vmem:[%s0 + $0xc] sm:$0xf]
  %v85 = vld [vmem:[%s0 + $0x10] sm:$0xf]
  %v86 = vld [vmem:[%s0 + $0x14] sm:$0xf]
  %v87 = vld [vmem:[%s0 + $0x18] sm:$0xf]
  %v88 = vld [vmem:[%s0 + $0x1c] sm:$0xf]
  %v89 = vld [vmem:[%s0 + $0x20] sm:$0xf]
  %v90 = vld [vmem:[%s0 + $0x24] sm:$0xf]
  %v91 = vld [vmem:[%s0 + $0x28] sm:$0xf]
  %v92 = vld [vmem:[%s0 + $0x2c] sm:$0xf]
  %v93 = vld [vmem:[%s0 + $0x30] sm:$0xf]
  %v94 = vld [vmem:[%s0 + $0x34] sm:$0xf]
  %v95 = vld [vmem:[%s0 + $0x38] sm:$0xf]
  %v96 = vld [vmem:[%s0 + $0x3c] sm:$0xf]
  %v113 = vunpack.c.l.b16 %v81
  %v114 = vunpack.c.l.b16 %v82
  %v115 = vunpack.c.l.b16 %v83
  %v116 = vunpack.c.l.b16 %v84
  %v117 = vunpack.c.l.b16 %v85
  %v118 = vunpack.c.l.b16 %v86
  %v119 = vunpack.c.l.b16 %v87
  %v120 = vunpack.c.l.b16 %v88
  %v121 = vunpack.c.l.b16 %v89
  %v122 = vunpack.c.l.b16 %v90
  %v123 = vunpack.c.l.b16 %v91
  %v124 = vunpack.c.l.b16 %v92
  %v125 = vunpack.c.l.b16 %v93
  %v126 = vunpack.c.l.b16 %v94
  %v127 = vunpack.c.l.b16 %v95
  %v128 = vunpack.c.l.b16 %v96
  %v129 = vpack.c.b16 %v114, %v113
  %v130 = vpack.c.b16 %v116, %v115
  %v131 = vpack.c.b16 %v118, %v117
  %v132 = vpack.c.b16 %v120, %v119
  %v133 = vpack.c.b16 %v122, %v121
  %v134 = vpack.c.b16 %v124, %v123
  %v135 = vpack.c.b16 %v126, %v125
  %v136 = vpack.c.b16 %v128, %v127
  %v161 = vunpack.c.l.b16 %v49
  %v162 = vunpack.c.l.b16 %v50
  %v163 = vunpack.c.l.b16 %v51
  %v164 = vunpack.c.l.b16 %v52
  %v165 = vunpack.c.l.b16 %v53
  %v166 = vunpack.c.l.b16 %v54
  %v167 = vunpack.c.l.b16 %v55
  %v168 = vunpack.c.l.b16 %v56
  %v169 = vunpack.c.l.b16 %v57
  %v170 = vunpack.c.l.b16 %v58
  %v171 = vunpack.c.l.b16 %v59
  %v172 = vunpack.c.l.b16 %v60
  %v173 = vunpack.c.l.b16 %v61
  %v174 = vunpack.c.l.b16 %v62
  %v175 = vunpack.c.l.b16 %v63
  %v176 = vunpack.c.l.b16 %v64
  %v177 = vpack.c.b16 %v162, %v161
  %v178 = vpack.c.b16 %v164, %v163
  %v179 = vpack.c.b16 %v166, %v165
  %v180 = vpack.c.b16 %v168, %v167
  %v181 = vpack.c.b16 %v170, %v169
  %v182 = vpack.c.b16 %v172, %v171
  %v183 = vpack.c.b16 %v174, %v173
  %v184 = vpack.c.b16 %v176, %v175
  %193 = vmatprep.subr.bf16.mxu0 0
  %194 = vmatpush1.bf16.msra.mxu0 %v184
  %195 = vmatprep.subr.bf16.mxu0 0
  %196 = vmatpush1.bf16.msra.mxu0 %v183
  %197 = vmatprep.subr.bf16.mxu0 0
  %198 = vmatpush1.bf16.msra.mxu0 %v182
  %199 = vmatprep.subr.bf16.mxu0 0
  %200 = vmatpush1.bf16.msra.mxu0 %v181
  %201 = vmatprep.subr.bf16.mxu0 0
  %202 = vmatpush1.bf16.msra.mxu0 %v180
  %203 = vmatprep.subr.bf16.mxu0 0
  %204 = vmatpush1.bf16.msra.mxu0 %v179
  %205 = vmatprep.subr.bf16.mxu0 0
  %206 = vmatpush1.bf16.msra.mxu0 %v178
  %207 = vmatprep.subr.bf16.mxu0 0
  %208 = vmatpush1.bf16.msra.mxu0 %v177
  %209 = vmatprep.subr.bf16.mxu0 0
  %210 = vmatpush2.bf16.msra.mxu0 0
  %211 = vmatprep.subr.bf16.mxu0 0
  %212 = vmatpush2.bf16.msra.mxu0 0
  %213 = vmatprep.subr.bf16.mxu0 0
  %214 = vmatpush2.bf16.msra.mxu0 0
  %215 = vmatprep.subr.bf16.mxu0 0
  %216 = vmatpush2.bf16.msra.mxu0 0
  %217 = vmatprep.subr.bf16.mxu0 0
  %218 = vmatpush2.bf16.msra.mxu0 0
  %219 = vmatprep.subr.bf16.mxu0 0
  %220 = vmatpush2.bf16.msra.mxu0 0
  %221 = vmatprep.subr.bf16.mxu0 0
  %222 = vmatpush2.bf16.msra.mxu0 0
  %223 = vmatprep.subr.bf16.mxu0 0
  %224 = vmatpush2.bf16.msra.mxu0 0
  %225 = vmatprep.mubr.bf16.mxu0 0
  %226 = vmatmul.mubr.bf16.gmra.mxu0 %v129
  %v227 = vpop.f32.mrf.mxu0
  %v228 = vadd.f32 0.0, %v227
  %v229 = vpop.f32.mrf.mxu0
  %v230 = vpop.f32.mrf.mxu0
  %v231 = vadd.f32 0.0, %v230
  %v232 = vpop.f32.mrf.mxu0
  %233 = vmatprep.mubr.bf16.mxu0 0
  %234 = vmatmul.mubr.bf16.gmra.mxu0 %v130
  %v235 = vpop.f32.mrf.mxu0
  %v236 = vadd.f32 0.0, %v235
  %v237 = vpop.f32.mrf.mxu0
  %v238 = vpop.f32.mrf.mxu0
  %v239 = vadd.f32 0.0, %v238
  %v240 = vpop.f32.mrf.mxu0
  %241 = vmatprep.mubr.bf16.mxu0 0
  %242 = vmatmul.mubr.bf16.gmra.mxu0 %v131
  %v243 = vpop.f32.mrf.mxu0
  %v244 = vadd.f32 0.0, %v243
  %v245 = vpop.f32.mrf.mxu0
  %v246 = vpop.f32.mrf.mxu0
  %v247 = vadd.f32 0.0, %v246
  %v248 = vpop.f32.mrf.mxu0
  %249 = vmatprep.mubr.bf16.mxu0 0
  %250 = vmatmul.mubr.bf16.gmra.mxu0 %v132
  %v251 = vpop.f32.mrf.mxu0
  %v252 = vadd.f32 0.0, %v251
  %v253 = vpop.f32.mrf.mxu0
  %v254 = vpop.f32.mrf.mxu0
  %v255 = vadd.f32 0.0, %v254
  %v256 = vpop.f32.mrf.mxu0
  %257 = vmatprep.mubr.bf16.mxu0 0
  %258 = vmatmul.mubr.bf16.gmra.mxu0 %v133
  %v259 = vpop.f32.mrf.mxu0
  %v260 = vadd.f32 0.0, %v259
  %v261 = vpop.f32.mrf.mxu0
  %v262 = vpop.f32.mrf.mxu0
  %v263 = vadd.f32 0.0, %v262
  %v264 = vpop.f32.mrf.mxu0
  %265 = vmatprep.mubr.bf16.mxu0 0
  %266 = vmatmul.mubr.bf16.gmra.mxu0 %v134
  %v267 = vpop.f32.mrf.mxu0
  %v268 = vadd.f32 0.0, %v267
  %v269 = vpop.f32.mrf.mxu0
  %v270 = vpop.f32.mrf.mxu0
  %v271 = vadd.f32 0.0, %v270
  %v272 = vpop.f32.mrf.mxu0
  %273 = vmatprep.mubr.bf16.mxu0 0
  %274 = vmatmul.mubr.bf16.gmra.mxu0 %v135
  %v275 = vpop.f32.mrf.mxu0
  %v276 = vadd.f32 0.0, %v275
  %v277 = vpop.f32.mrf.mxu0
  %v278 = vpop.f32.mrf.mxu0
  %v279 = vadd.f32 0.0, %v278
  %v280 = vpop.f32.mrf.mxu0
  %281 = vmatprep.mubr.bf16.mxu0 0
  %282 = vmatmul.mubr.bf16.gmra.mxu0 %v136
  %v283 = vpop.f32.mrf.mxu0
  %v284 = vadd.f32 0.0, %v283
  %v285 = vpop.f32.mrf.mxu0
  %v286 = vpop.f32.mrf.mxu0
  %v287 = vadd.f32 0.0, %v286
  %v288 = vpop.f32.mrf.mxu0
  %289 = vdwg.mxu0
  %v290 = vadd.f32 %v65, %v228
  %v291 = vadd.f32 %v66, %v231
  %v292 = vadd.f32 %v67, %v236
  %v293 = vadd.f32 %v68, %v239
  %v294 = vadd.f32 %v69, %v244
  %v295 = vadd.f32 %v70, %v247
  %v296 = vadd.f32 %v71, %v252
  %v297 = vadd.f32 %v72, %v255
  %v298 = vadd.f32 %v73, %v260
  %v299 = vadd.f32 %v74, %v263
  %v300 = vadd.f32 %v75, %v268
  %v301 = vadd.f32 %v76, %v271
  %v302 = vadd.f32 %v77, %v276
  %v303 = vadd.f32 %v78, %v279
  %v304 = vadd.f32 %v79, %v284
  %v305 = vadd.f32 %v80, %v287
  %306 = vst [vmem:[#allocation2] sm:$0xff] %v290
  %307 = vst [vmem:[#allocation2 + $0x8] sm:$0xff] %v291
  %308 = vst [vmem:[#allocation2 + $0x10] sm:$0xff] %v292
  %309 = vst [vmem:[#allocation2 + $0x18] sm:$0xff] %v293
  %310 = vst [vmem:[#allocation2 + $0x20] sm:$0xff] %v294
  %311 = vst [vmem:[#allocation2 + $0x28] sm:$0xff] %v295
  %312 = vst [vmem:[#allocation2 + $0x30] sm:$0xff] %v296
  %313 = vst [vmem:[#allocation2 + $0x38] sm:$0xff] %v297
  %314 = vst [vmem:[#allocation2 + $0x40] sm:$0xff] %v298
  %315 = vst [vmem:[#allocation2 + $0x48] sm:$0xff] %v299
  %316 = vst [vmem:[#allocation2 + $0x50] sm:$0xff] %v300
  %317 = vst [vmem:[#allocation2 + $0x58] sm:$0xff] %v301
  %318 = vst [vmem:[#allocation2 + $0x60] sm:$0xff] %v302
  %319 = vst [vmem:[#allocation2 + $0x68] sm:$0xff] %v303
  %320 = vst [vmem:[#allocation2 + $0x70] sm:$0xff] %v304
  %321 = vst [vmem:[#allocation2 + $0x78] sm:$0xff] %v305
  // Predicated region
  $region30: #{graphsage_forward.2} parent=0 // pred_check
    %p322 = pneg %p24
  $region31: #{graphsage_forward.2} parent=0 // pred_check_branch
    %324 = sbr.rel (%p322) target = $region33
  $region32: #{graphsage_forward.2} parent=0 // pred_region
    %v325 = vld [vmem:[#allocation2] sm:$0xff]
    %v326 = vld [vmem:[#allocation2 + $0x8] sm:$0xff]
    %v327 = vld [vmem:[#allocation2 + $0x10] sm:$0xff]
    %v328 = vld [vmem:[#allocation2 + $0x18] sm:$0xff]
    %v329 = vld [vmem:[#allocation2 + $0x20] sm:$0xff]
    %v330 = vld [vmem:[#allocation2 + $0x28] sm:$0xff]
    %v331 = vld [vmem:[#allocation2 + $0x30] sm:$0xff]
    %v332 = vld [vmem:[#allocation2 + $0x38] sm:$0xff]
    %v333 = vld [vmem:[#allocation2 + $0x40] sm:$0xff]
    %v334 = vld [vmem:[#allocation2 + $0x48] sm:$0xff]
    %v335 = vld [vmem:[#allocation2 + $0x50] sm:$0xff]
    %v336 = vld [vmem:[#allocation2 + $0x58] sm:$0xff]
    %v337 = vld [vmem:[#allocation2 + $0x60] sm:$0xff]
    %v338 = vld [vmem:[#allocation2 + $0x68] sm:$0xff]
    %v339 = vld [vmem:[#allocation2 + $0x70] sm:$0xff]
    %v340 = vld [vmem:[#allocation2 + $0x78] sm:$0xff]
    %v341 = vld [vmem:[%s3] sm:$0xff]
    %v342 = vld [vmem:[%s3 + $0x8] sm:$0xff]
    %v343 = vld [vmem:[%s3 + $0x10] sm:$0xff]
    %v344 = vld [vmem:[%s3 + $0x18] sm:$0xff]
    %v345 = vld [vmem:[%s3 + $0x20] sm:$0xff]
    %v346 = vld [vmem:[%s3 + $0x28] sm:$0xff]
    %v347 = vld [vmem:[%s3 + $0x30] sm:$0xff]
    %v348 = vld [vmem:[%s3 + $0x38] sm:$0xff]
    %v349 = vld [vmem:[%s3 + $0x40] sm:$0xff]
    %v350 = vld [vmem:[%s3 + $0x48] sm:$0xff]
    %v351 = vld [vmem:[%s3 + $0x50] sm:$0xff]
    %v352 = vld [vmem:[%s3 + $0x58] sm:$0xff]
    %v353 = vld [vmem:[%s3 + $0x60] sm:$0xff]
    %v354 = vld [vmem:[%s3 + $0x68] sm:$0xff]
    %v355 = vld [vmem:[%s3 + $0x70] sm:$0xff]
    %v356 = vld [vmem:[%s3 + $0x78] sm:$0xff]
    %358 = vset.pattern.permute.xlu0 0
    %359 = vperm.xlu0 %358, %v341
    %v360 = vpop.permute.xlu0 %359
    %363 = vset.pattern.permute.xlu0 0
    %364 = vperm.xlu0 %363, %v342
    %v365 = vpop.permute.xlu0 %364
    %368 = vset.pattern.permute.xlu0 0
    %369 = vperm.xlu0 %368, %v343
    %v370 = vpop.permute.xlu0 %369
    %373 = vset.pattern.permute.xlu0 0
    %374 = vperm.xlu0 %373, %v344
    %v375 = vpop.permute.xlu0 %374
    %378 = vset.pattern.permute.xlu0 0
    %379 = vperm.xlu0 %378, %v345
    %v380 = vpop.permute.xlu0 %379
    %383 = vset.pattern.permute.xlu0 0
    %384 = vperm.xlu0 %383, %v346
    %v385 = vpop.permute.xlu0 %384
    %388 = vset.pattern.permute.xlu0 0
    %389 = vperm.xlu0 %388, %v347
    %v390 = vpop.permute.xlu0 %389
    %393 = vset.pattern.permute.xlu0 0
    %394 = vperm.xlu0 %393, %v348
    %v395 = vpop.permute.xlu0 %394
    %398 = vset.pattern.permute.xlu0 0
    %399 = vperm.xlu0 %398, %v349
    %v400 = vpop.permute.xlu0 %399
    %403 = vset.pattern.permute.xlu0 0
    %404 = vperm.xlu0 %403, %v350
    %v405 = vpop.permute.xlu0 %404
    %408 = vset.pattern.permute.xlu0 0
    %409 = vperm.xlu0 %408, %v351
    %v410 = vpop.permute.xlu0 %409
    %413 = vset.pattern.permute.xlu0 0
    %414 = vperm.xlu0 %413, %v352
    %v415 = vpop.permute.xlu0 %414
    %418 = vset.pattern.permute.xlu0 0
    %419 = vperm.xlu0 %418, %v353
    %v420 = vpop.permute.xlu0 %419
    %423 = vset.pattern.permute.xlu0 0
    %424 = vperm.xlu0 %423, %v354
    %v425 = vpop.permute.xlu0 %424
    %428 = vset.pattern.permute.xlu0 0
    %429 = vperm.xlu0 %428, %v355
    %v430 = vpop.permute.xlu0 %429
    %433 = vset.pattern.permute.xlu0 0
    %434 = vperm.xlu0 %433, %v356
    %v435 = vpop.permute.xlu0 %434
    %v437 = vmul.f32 %v325, %v360
    %v438 = vmul.f32 %v326, %v365
    %v439 = vmul.f32 %v327, %v370
    %v440 = vmul.f32 %v328, %v375
    %v441 = vmul.f32 %v329, %v380
    %v442 = vmul.f32 %v330, %v385
    %v443 = vmul.f32 %v331, %v390
    %v444 = vmul.f32 %v332, %v395
    %v445 = vmul.f32 %v333, %v400
    %v446 = vmul.f32 %v334, %v405
    %v447 = vmul.f32 %v335, %v410
    %v448 = vmul.f32 %v336, %v415
    %v449 = vmul.f32 %v337, %v420
    %v450 = vmul.f32 %v338, %v425
    %v451 = vmul.f32 %v339, %v430
    %v452 = vmul.f32 %v340, %v435
    %v453 = vpack.c.bf16 %v438, %v437
    %v454 = vpack.c.bf16 %v440, %v439
    %v455 = vpack.c.bf16 %v442, %v441
    %v456 = vpack.c.bf16 %v444, %v443
    %v457 = vpack.c.bf16 %v446, %v445
    %v458 = vpack.c.bf16 %v448, %v447
    %v459 = vpack.c.bf16 %v450, %v449
    %v460 = vpack.c.bf16 %v452, %v451
    %v461 = vld [vmem:[%s2] sm:$0xf]
    %v462 = vld [vmem:[%s2 + $0x4] sm:$0xf]
    %v463 = vld [vmem:[%s2 + $0x8] sm:$0xf]
    %v464 = vld [vmem:[%s2 + $0xc] sm:$0xf]
    %v465 = vld [vmem:[%s2 + $0x10] sm:$0xf]
    %v466 = vld [vmem:[%s2 + $0x14] sm:$0xf]
    %v467 = vld [vmem:[%s2 + $0x18] sm:$0xf]
    %v468 = vld [vmem:[%s2 + $0x1c] sm:$0xf]
    %v469 = vld [vmem:[%s2 + $0x20] sm:$0xf]
    %v470 = vld [vmem:[%s2 + $0x24] sm:$0xf]
    %v471 = vld [vmem:[%s2 + $0x28] sm:$0xf]
    %v472 = vld [vmem:[%s2 + $0x2c] sm:$0xf]
    %v473 = vld [vmem:[%s2 + $0x30] sm:$0xf]
    %v474 = vld [vmem:[%s2 + $0x34] sm:$0xf]
    %v475 = vld [vmem:[%s2 + $0x38] sm:$0xf]
    %v476 = vld [vmem:[%s2 + $0x3c] sm:$0xf]
    %v493 = vunpack.c.l.b16 %v461
    %v494 = vunpack.c.l.b16 %v462
    %v495 = vunpack.c.l.b16 %v463
    %v496 = vunpack.c.l.b16 %v464
    %v497 = vunpack.c.l.b16 %v465
    %v498 = vunpack.c.l.b16 %v466
    %v499 = vunpack.c.l.b16 %v467
    %v500 = vunpack.c.l.b16 %v468
    %v501 = vunpack.c.l.b16 %v469
    %v502 = vunpack.c.l.b16 %v470
    %v503 = vunpack.c.l.b16 %v471
    %v504 = vunpack.c.l.b16 %v472
    %v505 = vunpack.c.l.b16 %v473
    %v506 = vunpack.c.l.b16 %v474
    %v507 = vunpack.c.l.b16 %v475
    %v508 = vunpack.c.l.b16 %v476
    %v509 = vpack.c.b16 %v494, %v493
    %v510 = vpack.c.b16 %v496, %v495
    %v511 = vpack.c.b16 %v498, %v497
    %v512 = vpack.c.b16 %v500, %v499
    %v513 = vpack.c.b16 %v502, %v501
    %v514 = vpack.c.b16 %v504, %v503
    %v515 = vpack.c.b16 %v506, %v505
    %v516 = vpack.c.b16 %v508, %v507
    %v525 = vld [vmem:[%s4] sm:$0xf]
    %v526 = vld [vmem:[%s4 + $0x4] sm:$0xf]
    %v527 = vld [vmem:[%s4 + $0x8] sm:$0xf]
    %v528 = vld [vmem:[%s4 + $0xc] sm:$0xf]
    %v529 = vld [vmem:[%s4 + $0x10] sm:$0xf]
    %v530 = vld [vmem:[%s4 + $0x14] sm:$0xf]
    %v531 = vld [vmem:[%s4 + $0x18] sm:$0xf]
    %v532 = vld [vmem:[%s4 + $0x1c] sm:$0xf]
    %v533 = vld [vmem:[%s4 + $0x20] sm:$0xf]
    %v534 = vld [vmem:[%s4 + $0x24] sm:$0xf]
    %v535 = vld [vmem:[%s4 + $0x28] sm:$0xf]
    %v536 = vld [vmem:[%s4 + $0x2c] sm:$0xf]
    %v537 = vld [vmem:[%s4 + $0x30] sm:$0xf]
    %v538 = vld [vmem:[%s4 + $0x34] sm:$0xf]
    %v539 = vld [vmem:[%s4 + $0x38] sm:$0xf]
    %v540 = vld [vmem:[%s4 + $0x3c] sm:$0xf]
    %v541 = vld [vmem:[%s4 + $0x40] sm:$0xf]
    %v542 = vld [vmem:[%s4 + $0x44] sm:$0xf]
    %v543 = vld [vmem:[%s4 + $0x48] sm:$0xf]
    %v544 = vld [vmem:[%s4 + $0x4c] sm:$0xf]
    %v545 = vld [vmem:[%s4 + $0x50] sm:$0xf]
    %v546 = vld [vmem:[%s4 + $0x54] sm:$0xf]
    %v547 = vld [vmem:[%s4 + $0x58] sm:$0xf]
    %v548 = vld [vmem:[%s4 + $0x5c] sm:$0xf]
    %v549 = vld [vmem:[%s4 + $0x60] sm:$0xf]
    %v550 = vld [vmem:[%s4 + $0x64] sm:$0xf]
    %v551 = vld [vmem:[%s4 + $0x68] sm:$0xf]
    %v552 = vld [vmem:[%s4 + $0x6c] sm:$0xf]
    %v553 = vld [vmem:[%s4 + $0x70] sm:$0xf]
    %v554 = vld [vmem:[%s4 + $0x74] sm:$0xf]
    %v555 = vld [vmem:[%s4 + $0x78] sm:$0xf]
    %v556 = vld [vmem:[%s4 + $0x7c] sm:$0xf]
    %v557 = vld [vmem:[%s5] sm:$0x1]
    %v559 = vlaneseq
    %v560 = vshrl.u32 %v559, 7
    %v561 = vsub.s32 0, %v560
    %v562 = vrot.slane %v557, %v561
    %v596 = vunpack.c.l.b16 %v525
    %v597 = vunpack.c.l.b16 %v526
    %v598 = vunpack.c.l.b16 %v527
    %v599 = vunpack.c.l.b16 %v528
    %v600 = vunpack.c.l.b16 %v529
    %v601 = vunpack.c.l.b16 %v530
    %v602 = vunpack.c.l.b16 %v531
    %v603 = vunpack.c.l.b16 %v532
    %v604 = vunpack.c.l.b16 %v533
    %v605 = vunpack.c.l.b16 %v534
    %v606 = vunpack.c.l.b16 %v535
    %v607 = vunpack.c.l.b16 %v536
    %v608 = vunpack.c.l.b16 %v537
    %v609 = vunpack.c.l.b16 %v538
    %v610 = vunpack.c.l.b16 %v539
    %v611 = vunpack.c.l.b16 %v540
    %v612 = vunpack.c.l.b16 %v541
    %v613 = vunpack.c.l.b16 %v542
    %v614 = vunpack.c.l.b16 %v543
    %v615 = vunpack.c.l.b16 %v544
    %v616 = vunpack.c.l.b16 %v545
    %v617 = vunpack.c.l.b16 %v546
    %v618 = vunpack.c.l.b16 %v547
    %v619 = vunpack.c.l.b16 %v548
    %v620 = vunpack.c.l.b16 %v549
    %v621 = vunpack.c.l.b16 %v550
    %v622 = vunpack.c.l.b16 %v551
    %v623 = vunpack.c.l.b16 %v552
    %v624 = vunpack.c.l.b16 %v553
    %v625 = vunpack.c.l.b16 %v554
    %v626 = vunpack.c.l.b16 %v555
    %v627 = vunpack.c.l.b16 %v556
    %v628 = vpack.c.b16 %v597, %v596
    %v629 = vpack.c.b16 %v599, %v598
    %v630 = vpack.c.b16 %v601, %v600
    %v631 = vpack.c.b16 %v603, %v602
    %v632 = vpack.c.b16 %v605, %v604
    %v633 = vpack.c.b16 %v607, %v606
    %v634 = vpack.c.b16 %v609, %v608
    %v635 = vpack.c.b16 %v611, %v610
    %v636 = vpack.c.b16 %v613, %v612
    %v637 = vpack.c.b16 %v615, %v614
    %v638 = vpack.c.b16 %v617, %v616
    %v639 = vpack.c.b16 %v619, %v618
    %v640 = vpack.c.b16 %v621, %v620
    %v641 = vpack.c.b16 %v623, %v622
    %v642 = vpack.c.b16 %v625, %v624
    %v643 = vpack.c.b16 %v627, %v626
    %660 = vmatprep.subr.bf16.mxu0 0
    %661 = vmatpush1.bf16.msra.mxu0 %v635
    %662 = vmatprep.subr.bf16.mxu0 0
    %663 = vmatpush1.bf16.msra.mxu0 %v634
    %664 = vmatprep.subr.bf16.mxu0 0
    %665 = vmatpush1.bf16.msra.mxu0 %v633
    %666 = vmatprep.subr.bf16.mxu0 0
    %667 = vmatpush1.bf16.msra.mxu0 %v632
    %668 = vmatprep.subr.bf16.mxu0 0
    %669 = vmatpush1.bf16.msra.mxu0 %v631
    %670 = vmatprep.subr.bf16.mxu0 0
    %671 = vmatpush1.bf16.msra.mxu0 %v630
    %672 = vmatprep.subr.bf16.mxu0 0
    %673 = vmatpush1.bf16.msra.mxu0 %v629
    %674 = vmatprep.subr.bf16.mxu0 0
    %675 = vmatpush1.bf16.msra.mxu0 %v628
    %676 = vmatprep.subr.bf16.mxu0 0
    %677 = vmatpush2.bf16.msra.mxu0 %v643
    %678 = vmatprep.subr.bf16.mxu0 0
    %679 = vmatpush2.bf16.msra.mxu0 %v642
    %680 = vmatprep.subr.bf16.mxu0 0
    %681 = vmatpush2.bf16.msra.mxu0 %v641
    %682 = vmatprep.subr.bf16.mxu0 0
    %683 = vmatpush2.bf16.msra.mxu0 %v640
    %684 = vmatprep.subr.bf16.mxu0 0
    %685 = vmatpush2.bf16.msra.mxu0 %v639
    %686 = vmatprep.subr.bf16.mxu0 0
    %687 = vmatpush2.bf16.msra.mxu0 %v638
    %688 = vmatprep.subr.bf16.mxu0 0
    %689 = vmatpush2.bf16.msra.mxu0 %v637
    %690 = vmatprep.subr.bf16.mxu0 0
    %691 = vmatpush2.bf16.msra.mxu0 %v636
    %692 = vmatprep.mubr.bf16.mxu0 %v509
    %693 = vmatmul.mubr.bf16.gmra.mxu0 %v453
    %v694 = vpop.f32.mrf.mxu0
    %v695 = vadd.f32 %v562, %v694
    %v696 = vpop.f32.mrf.mxu0
    %v697 = vpop.f32.mrf.mxu0
    %v698 = vadd.f32 %v562, %v697
    %v699 = vpop.f32.mrf.mxu0
    %700 = vmatprep.mubr.bf16.mxu0 %v510
    %701 = vmatmul.mubr.bf16.gmra.mxu0 %v454
    %v702 = vpop.f32.mrf.mxu0
    %v703 = vadd.f32 %v562, %v702
    %v704 = vpop.f32.mrf.mxu0
    %v705 = vpop.f32.mrf.mxu0
    %v706 = vadd.f32 %v562, %v705
    %v707 = vpop.f32.mrf.mxu0
    %708 = vmatprep.mubr.bf16.mxu0 %v511
    %709 = vmatmul.mubr.bf16.gmra.mxu0 %v455
    %v710 = vpop.f32.mrf.mxu0
    %v711 = vadd.f32 %v562, %v710
    %v712 = vpop.f32.mrf.mxu0
    %v713 = vpop.f32.mrf.mxu0
    %v714 = vadd.f32 %v562, %v713
    %v715 = vpop.f32.mrf.mxu0
    %716 = vmatprep.mubr.bf16.mxu0 %v512
    %717 = vmatmul.mubr.bf16.gmra.mxu0 %v456
    %v718 = vpop.f32.mrf.mxu0
    %v719 = vadd.f32 %v562, %v718
    %v720 = vpop.f32.mrf.mxu0
    %v721 = vpop.f32.mrf.mxu0
    %v722 = vadd.f32 %v562, %v721
    %v723 = vpop.f32.mrf.mxu0
    %724 = vmatprep.mubr.bf16.mxu0 %v513
    %725 = vmatmul.mubr.bf16.gmra.mxu0 %v457
    %v726 = vpop.f32.mrf.mxu0
    %v727 = vadd.f32 %v562, %v726
    %v728 = vpop.f32.mrf.mxu0
    %v729 = vpop.f32.mrf.mxu0
    %v730 = vadd.f32 %v562, %v729
    %v731 = vpop.f32.mrf.mxu0
    %732 = vmatprep.mubr.bf16.mxu0 %v514
    %733 = vmatmul.mubr.bf16.gmra.mxu0 %v458
    %v734 = vpop.f32.mrf.mxu0
    %v735 = vadd.f32 %v562, %v734
    %v736 = vpop.f32.mrf.mxu0
    %v737 = vpop.f32.mrf.mxu0
    %v738 = vadd.f32 %v562, %v737
    %v739 = vpop.f32.mrf.mxu0
    %740 = vmatprep.mubr.bf16.mxu0 %v515
    %741 = vmatmul.mubr.bf16.gmra.mxu0 %v459
    %v742 = vpop.f32.mrf.mxu0
    %v743 = vadd.f32 %v562, %v742
    %v744 = vpop.f32.mrf.mxu0
    %v745 = vpop.f32.mrf.mxu0
    %v746 = vadd.f32 %v562, %v745
    %v747 = vpop.f32.mrf.mxu0
    %748 = vmatprep.mubr.bf16.mxu0 %v516
    %749 = vmatmul.mubr.bf16.gmra.mxu0 %v460
    %v750 = vpop.f32.mrf.mxu0
    %v751 = vadd.f32 %v562, %v750
    %v752 = vpop.f32.mrf.mxu0
    %v753 = vpop.f32.mrf.mxu0
    %v754 = vadd.f32 %v562, %v753
    %v755 = vpop.f32.mrf.mxu0
    %756 = vdwg.mxu0
    %v757 = vmax.f32 %v695, 0.0
    %v758 = vmax.f32 %v698, 0.0
    %v759 = vmax.f32 %v703, 0.0
    %v760 = vmax.f32 %v706, 0.0
    %v761 = vmax.f32 %v711, 0.0
    %v762 = vmax.f32 %v714, 0.0
    %v763 = vmax.f32 %v719, 0.0
    %v764 = vmax.f32 %v722, 0.0
    %v765 = vmax.f32 %v727, 0.0
    %v766 = vmax.f32 %v730, 0.0
    %v767 = vmax.f32 %v735, 0.0
    %v768 = vmax.f32 %v738, 0.0
    %v769 = vmax.f32 %v743, 0.0
    %v770 = vmax.f32 %v746, 0.0
    %v771 = vmax.f32 %v751, 0.0
    %v772 = vmax.f32 %v754, 0.0
    %v773 = vpack.c.bf16 %v758, %v757
    %v774 = vpack.c.bf16 %v760, %v759
    %v775 = vpack.c.bf16 %v762, %v761
    %v776 = vpack.c.bf16 %v764, %v763
    %v777 = vpack.c.bf16 %v766, %v765
    %v778 = vpack.c.bf16 %v768, %v767
    %v779 = vpack.c.bf16 %v770, %v769
    %v780 = vpack.c.bf16 %v772, %v771
    %v789 = vunpack.c.l.b16 %v773
    %v790 = vunpack.c.h.b16 %v773
    %v791 = vunpack.c.l.b16 %v774
    %v792 = vunpack.c.h.b16 %v774
    %v793 = vunpack.c.l.b16 %v775
    %v794 = vunpack.c.h.b16 %v775
    %v795 = vunpack.c.l.b16 %v776
    %v796 = vunpack.c.h.b16 %v776
    %v797 = vunpack.c.l.b16 %v777
    %v798 = vunpack.c.h.b16 %v777
    %v799 = vunpack.c.l.b16 %v778
    %v800 = vunpack.c.h.b16 %v778
    %v801 = vunpack.c.l.b16 %v779
    %v802 = vunpack.c.h.b16 %v779
    %v803 = vunpack.c.l.b16 %v780
    %v804 = vunpack.c.h.b16 %v780
    %v805 = vpack.c.b16 %v789, %v789
    %v806 = vpack.c.b16 %v790, %v790
    %v807 = vpack.c.b16 %v791, %v791
    %v808 = vpack.c.b16 %v792, %v792
    %v809 = vpack.c.b16 %v793, %v793
    %v810 = vpack.c.b16 %v794, %v794
    %v811 = vpack.c.b16 %v795, %v795
    %v812 = vpack.c.b16 %v796, %v796
    %v813 = vpack.c.b16 %v797, %v797
    %v814 = vpack.c.b16 %v798, %v798
    %v815 = vpack.c.b16 %v799, %v799
    %v816 = vpack.c.b16 %v800, %v800
    %v817 = vpack.c.b16 %v801, %v801
    %v818 = vpack.c.b16 %v802, %v802
    %v819 = vpack.c.b16 %v803, %v803
    %v820 = vpack.c.b16 %v804, %v804
    %837 = vst [vmem:[%s6] sm:$0xf] %v805
    %838 = vst [vmem:[%s6 + $0x4] sm:$0xf] %v806
    %839 = vst [vmem:[%s6 + $0x8] sm:$0xf] %v807
    %840 = vst [vmem:[%s6 + $0xc] sm:$0xf] %v808
    %841 = vst [vmem:[%s6 + $0x10] sm:$0xf] %v809
    %842 = vst [vmem:[%s6 + $0x14] sm:$0xf] %v810
    %843 = vst [vmem:[%s6 + $0x18] sm:$0xf] %v811
    %844 = vst [vmem:[%s6 + $0x1c] sm:$0xf] %v812
    %845 = vst [vmem:[%s6 + $0x20] sm:$0xf] %v813
    %846 = vst [vmem:[%s6 + $0x24] sm:$0xf] %v814
    %847 = vst [vmem:[%s6 + $0x28] sm:$0xf] %v815
    %848 = vst [vmem:[%s6 + $0x2c] sm:$0xf] %v816
    %849 = vst [vmem:[%s6 + $0x30] sm:$0xf] %v817
    %850 = vst [vmem:[%s6 + $0x34] sm:$0xf] %v818
    %851 = vst [vmem:[%s6 + $0x38] sm:$0xf] %v819
    %852 = vst [vmem:[%s6 + $0x3c] sm:$0xf] %v820
  $region33: #{graphsage_forward.2} parent=0 // pred_fallthru
    _
  // Predicated region
  $region34: #{graphsage_forward.2} parent=0 // pred_check
    _
  $region35: #{graphsage_forward.2} parent=0 // pred_check_branch
    %854 = sbr.rel (0) target = $region37
  $region36: #{graphsage_forward.2} parent=0 // pred_region
    _
  $region37: #{graphsage_forward.2} parent=0 // pred_fallthru
    _
  // Predicated region
  $region38: #{graphsage_forward.2} parent=0 // pred_check
    _
  $region39: #{graphsage_forward.2} parent=0 // pred_check_branch
    %856 = sbr.rel (0) target = $region41
  $region40: #{graphsage_forward.2} parent=0 // pred_region
    _
  $region41: #{graphsage_forward.2} parent=0 // pred_fallthru
    _

// kernel: graphsage_forward.3
$region0: #{graphsage_forward.3}
  #allocation0 [shape = 'u32[]', space=smem, size = 0x4, offset = 0x4, fixed_abs, tag = 'smem constant byte address 0x4 - core index']
  #allocation1 [shape = 'u32[144,128]{1,0:T(1,128)}', space=vmem, size = 0x12000, scoped, tag = 'internal scratch']
  #allocation2 [shape = 'f32[128,128]{1,0:T(8,128)}', space=vmem, size = 0x10000, scoped, tag = 'scratch operand']
  %s0 = inlined_call_operand.vmem [shape: bf16[128,128], index: 0, kind: input, shape index: {}]
  %s1 = inlined_call_operand.vmem [shape: bf16[128,128], index: 1, kind: input, shape index: {}, may-alias: {1,2}]
  %s2 = inlined_call_operand.vmem [shape: bf16[128,128], index: 2, kind: input, shape index: {}, may-alias: {1,2}]
  %s3 = inlined_call_operand.vmem [shape: f32[128,1], index: 3, kind: input, shape index: {}]
  %s4 = inlined_call_operand.vmem [shape: bf16[256,128], index: 4, kind: input, shape index: {}]
  %s5 = inlined_call_operand.vmem [shape: f32[1,128], index: 5, kind: input, shape index: {}]
  %s6 = inlined_call_operand.vmem [shape: f32[128,128], index: 6, kind: output, shape index: {}]
  %s7 = sld [smem:[#allocation0]]
  $region42: #{graphsage_forward.3} parent=0
    _
  %s9 = ssub.s32 1, %s7
  %s10 = scalar_select 0, %s9, %s7
  // Predicated region
  $region2: #{graphsage_forward.3} parent=0 // pred_check
    _
  $region3: #{graphsage_forward.3} parent=0 // pred_check_branch
    %12 = sbr.rel (0) target = $region5
  $region4: #{graphsage_forward.3} parent=0 // pred_region
    _
  $region5: #{graphsage_forward.3} parent=0 // pred_fallthru
    _
  // Predicated region
  $region6: #{graphsage_forward.3} parent=0 // pred_check
    _
  $region7: #{graphsage_forward.3} parent=0 // pred_check_branch
    %14 = sbr.rel (0) target = $region9
  $region8: #{graphsage_forward.3} parent=0 // pred_region
    _
  $region9: #{graphsage_forward.3} parent=0 // pred_fallthru
    _
  // Predicated region
  $region10: #{graphsage_forward.3} parent=0 // pred_check
    _
  $region11: #{graphsage_forward.3} parent=0 // pred_check_branch
    %16 = sbr.rel (0) target = $region13
  $region12: #{graphsage_forward.3} parent=0 // pred_region
    _
  $region13: #{graphsage_forward.3} parent=0 // pred_fallthru
    _
  // Predicated region
  $region14: #{graphsage_forward.3} parent=0 // pred_check
    _
  $region15: #{graphsage_forward.3} parent=0 // pred_check_branch
    %18 = sbr.rel (0) target = $region17
  $region16: #{graphsage_forward.3} parent=0 // pred_region
    _
  $region17: #{graphsage_forward.3} parent=0 // pred_fallthru
    _
  // Predicated region
  $region18: #{graphsage_forward.3} parent=0 // pred_check
    _
  $region19: #{graphsage_forward.3} parent=0 // pred_check_branch
    %20 = sbr.rel (0) target = $region21
  $region20: #{graphsage_forward.3} parent=0 // pred_region
    _
  $region21: #{graphsage_forward.3} parent=0 // pred_fallthru
    _
  // Predicated region
  $region22: #{graphsage_forward.3} parent=0 // pred_check
    _
  $region23: #{graphsage_forward.3} parent=0 // pred_check_branch
    %22 = sbr.rel (0) target = $region25
  $region24: #{graphsage_forward.3} parent=0 // pred_region
    _
  $region25: #{graphsage_forward.3} parent=0 // pred_fallthru
    _
  %p24 = scmp.eq.s32.totalorder 0, 0
  // Predicated region
  $region26: #{graphsage_forward.3} parent=0 // pred_check
    %p25 = pneg %p24
  $region27: #{graphsage_forward.3} parent=0 // pred_check_branch
    %27 = sbr.rel (%p25) target = $region29
  $region28: #{graphsage_forward.3} parent=0 // pred_region
    %28 = vst [vmem:[#allocation2] sm:$0xff] 0.0
    %29 = vst [vmem:[#allocation2 + $0x8] sm:$0xff] 0.0
    %30 = vst [vmem:[#allocation2 + $0x10] sm:$0xff] 0.0
    %31 = vst [vmem:[#allocation2 + $0x18] sm:$0xff] 0.0
    %32 = vst [vmem:[#allocation2 + $0x20] sm:$0xff] 0.0
    %33 = vst [vmem:[#allocation2 + $0x28] sm:$0xff] 0.0
    %34 = vst [vmem:[#allocation2 + $0x30] sm:$0xff] 0.0
    %35 = vst [vmem:[#allocation2 + $0x38] sm:$0xff] 0.0
    %36 = vst [vmem:[#allocation2 + $0x40] sm:$0xff] 0.0
    %37 = vst [vmem:[#allocation2 + $0x48] sm:$0xff] 0.0
    %38 = vst [vmem:[#allocation2 + $0x50] sm:$0xff] 0.0
    %39 = vst [vmem:[#allocation2 + $0x58] sm:$0xff] 0.0
    %40 = vst [vmem:[#allocation2 + $0x60] sm:$0xff] 0.0
    %41 = vst [vmem:[#allocation2 + $0x68] sm:$0xff] 0.0
    %42 = vst [vmem:[#allocation2 + $0x70] sm:$0xff] 0.0
    %43 = vst [vmem:[#allocation2 + $0x78] sm:$0xff] 0.0
  $region29: #{graphsage_forward.3} parent=0 // pred_fallthru
    _
  %s44 = smul.u32 0, 128
  %s45 = sshra.s32 %s44, 3
  %s46 = sand.u32 %s44, 7
  %s47 = smul.addr %s45, 4
  %s48 = scalar_lea.vmem %s1, %s47
  %v49 = vld [vmem:[%s48] sm:$0xf]
  %v50 = vld [vmem:[%s48 + $0x4] sm:$0xf]
  %v51 = vld [vmem:[%s48 + $0x8] sm:$0xf]
  %v52 = vld [vmem:[%s48 + $0xc] sm:$0xf]
  %v53 = vld [vmem:[%s48 + $0x10] sm:$0xf]
  %v54 = vld [vmem:[%s48 + $0x14] sm:$0xf]
  %v55 = vld [vmem:[%s48 + $0x18] sm:$0xf]
  %v56 = vld [vmem:[%s48 + $0x1c] sm:$0xf]
  %v57 = vld [vmem:[%s48 + $0x20] sm:$0xf]
  %v58 = vld [vmem:[%s48 + $0x24] sm:$0xf]
  %v59 = vld [vmem:[%s48 + $0x28] sm:$0xf]
  %v60 = vld [vmem:[%s48 + $0x2c] sm:$0xf]
  %v61 = vld [vmem:[%s48 + $0x30] sm:$0xf]
  %v62 = vld [vmem:[%s48 + $0x34] sm:$0xf]
  %v63 = vld [vmem:[%s48 + $0x38] sm:$0xf]
  %v64 = vld [vmem:[%s48 + $0x3c] sm:$0xf]
  %v65 = vld [vmem:[#allocation2] sm:$0xff]
  %v66 = vld [vmem:[#allocation2 + $0x8] sm:$0xff]
  %v67 = vld [vmem:[#allocation2 + $0x10] sm:$0xff]
  %v68 = vld [vmem:[#allocation2 + $0x18] sm:$0xff]
  %v69 = vld [vmem:[#allocation2 + $0x20] sm:$0xff]
  %v70 = vld [vmem:[#allocation2 + $0x28] sm:$0xff]
  %v71 = vld [vmem:[#allocation2 + $0x30] sm:$0xff]
  %v72 = vld [vmem:[#allocation2 + $0x38] sm:$0xff]
  %v73 = vld [vmem:[#allocation2 + $0x40] sm:$0xff]
  %v74 = vld [vmem:[#allocation2 + $0x48] sm:$0xff]
  %v75 = vld [vmem:[#allocation2 + $0x50] sm:$0xff]
  %v76 = vld [vmem:[#allocation2 + $0x58] sm:$0xff]
  %v77 = vld [vmem:[#allocation2 + $0x60] sm:$0xff]
  %v78 = vld [vmem:[#allocation2 + $0x68] sm:$0xff]
  %v79 = vld [vmem:[#allocation2 + $0x70] sm:$0xff]
  %v80 = vld [vmem:[#allocation2 + $0x78] sm:$0xff]
  %v81 = vld [vmem:[%s0] sm:$0xf]
  %v82 = vld [vmem:[%s0 + $0x4] sm:$0xf]
  %v83 = vld [vmem:[%s0 + $0x8] sm:$0xf]
  %v84 = vld [vmem:[%s0 + $0xc] sm:$0xf]
  %v85 = vld [vmem:[%s0 + $0x10] sm:$0xf]
  %v86 = vld [vmem:[%s0 + $0x14] sm:$0xf]
  %v87 = vld [vmem:[%s0 + $0x18] sm:$0xf]
  %v88 = vld [vmem:[%s0 + $0x1c] sm:$0xf]
  %v89 = vld [vmem:[%s0 + $0x20] sm:$0xf]
  %v90 = vld [vmem:[%s0 + $0x24] sm:$0xf]
  %v91 = vld [vmem:[%s0 + $0x28] sm:$0xf]
  %v92 = vld [vmem:[%s0 + $0x2c] sm:$0xf]
  %v93 = vld [vmem:[%s0 + $0x30] sm:$0xf]
  %v94 = vld [vmem:[%s0 + $0x34] sm:$0xf]
  %v95 = vld [vmem:[%s0 + $0x38] sm:$0xf]
  %v96 = vld [vmem:[%s0 + $0x3c] sm:$0xf]
  %v113 = vunpack.c.l.b16 %v81
  %v114 = vunpack.c.l.b16 %v82
  %v115 = vunpack.c.l.b16 %v83
  %v116 = vunpack.c.l.b16 %v84
  %v117 = vunpack.c.l.b16 %v85
  %v118 = vunpack.c.l.b16 %v86
  %v119 = vunpack.c.l.b16 %v87
  %v120 = vunpack.c.l.b16 %v88
  %v121 = vunpack.c.l.b16 %v89
  %v122 = vunpack.c.l.b16 %v90
  %v123 = vunpack.c.l.b16 %v91
  %v124 = vunpack.c.l.b16 %v92
  %v125 = vunpack.c.l.b16 %v93
  %v126 = vunpack.c.l.b16 %v94
  %v127 = vunpack.c.l.b16 %v95
  %v128 = vunpack.c.l.b16 %v96
  %v129 = vpack.c.b16 %v114, %v113
  %v130 = vpack.c.b16 %v116, %v115
  %v131 = vpack.c.b16 %v118, %v117
  %v132 = vpack.c.b16 %v120, %v119
  %v133 = vpack.c.b16 %v122, %v121
  %v134 = vpack.c.b16 %v124, %v123
  %v135 = vpack.c.b16 %v126, %v125
  %v136 = vpack.c.b16 %v128, %v127
  %v161 = vunpack.c.l.b16 %v49
  %v162 = vunpack.c.l.b16 %v50
  %v163 = vunpack.c.l.b16 %v51
  %v164 = vunpack.c.l.b16 %v52
  %v165 = vunpack.c.l.b16 %v53
  %v166 = vunpack.c.l.b16 %v54
  %v167 = vunpack.c.l.b16 %v55
  %v168 = vunpack.c.l.b16 %v56
  %v169 = vunpack.c.l.b16 %v57
  %v170 = vunpack.c.l.b16 %v58
  %v171 = vunpack.c.l.b16 %v59
  %v172 = vunpack.c.l.b16 %v60
  %v173 = vunpack.c.l.b16 %v61
  %v174 = vunpack.c.l.b16 %v62
  %v175 = vunpack.c.l.b16 %v63
  %v176 = vunpack.c.l.b16 %v64
  %v177 = vpack.c.b16 %v162, %v161
  %v178 = vpack.c.b16 %v164, %v163
  %v179 = vpack.c.b16 %v166, %v165
  %v180 = vpack.c.b16 %v168, %v167
  %v181 = vpack.c.b16 %v170, %v169
  %v182 = vpack.c.b16 %v172, %v171
  %v183 = vpack.c.b16 %v174, %v173
  %v184 = vpack.c.b16 %v176, %v175
  %193 = vmatprep.subr.bf16.mxu0 0
  %194 = vmatpush1.bf16.msra.mxu0 %v184
  %195 = vmatprep.subr.bf16.mxu0 0
  %196 = vmatpush1.bf16.msra.mxu0 %v183
  %197 = vmatprep.subr.bf16.mxu0 0
  %198 = vmatpush1.bf16.msra.mxu0 %v182
  %199 = vmatprep.subr.bf16.mxu0 0
  %200 = vmatpush1.bf16.msra.mxu0 %v181
  %201 = vmatprep.subr.bf16.mxu0 0
  %202 = vmatpush1.bf16.msra.mxu0 %v180
  %203 = vmatprep.subr.bf16.mxu0 0
  %204 = vmatpush1.bf16.msra.mxu0 %v179
  %205 = vmatprep.subr.bf16.mxu0 0
  %206 = vmatpush1.bf16.msra.mxu0 %v178
  %207 = vmatprep.subr.bf16.mxu0 0
  %208 = vmatpush1.bf16.msra.mxu0 %v177
  %209 = vmatprep.subr.bf16.mxu0 0
  %210 = vmatpush2.bf16.msra.mxu0 0
  %211 = vmatprep.subr.bf16.mxu0 0
  %212 = vmatpush2.bf16.msra.mxu0 0
  %213 = vmatprep.subr.bf16.mxu0 0
  %214 = vmatpush2.bf16.msra.mxu0 0
  %215 = vmatprep.subr.bf16.mxu0 0
  %216 = vmatpush2.bf16.msra.mxu0 0
  %217 = vmatprep.subr.bf16.mxu0 0
  %218 = vmatpush2.bf16.msra.mxu0 0
  %219 = vmatprep.subr.bf16.mxu0 0
  %220 = vmatpush2.bf16.msra.mxu0 0
  %221 = vmatprep.subr.bf16.mxu0 0
  %222 = vmatpush2.bf16.msra.mxu0 0
  %223 = vmatprep.subr.bf16.mxu0 0
  %224 = vmatpush2.bf16.msra.mxu0 0
  %225 = vmatprep.mubr.bf16.mxu0 0
  %226 = vmatmul.mubr.bf16.gmra.mxu0 %v129
  %v227 = vpop.f32.mrf.mxu0
  %v228 = vadd.f32 0.0, %v227
  %v229 = vpop.f32.mrf.mxu0
  %v230 = vpop.f32.mrf.mxu0
  %v231 = vadd.f32 0.0, %v230
  %v232 = vpop.f32.mrf.mxu0
  %233 = vmatprep.mubr.bf16.mxu0 0
  %234 = vmatmul.mubr.bf16.gmra.mxu0 %v130
  %v235 = vpop.f32.mrf.mxu0
  %v236 = vadd.f32 0.0, %v235
  %v237 = vpop.f32.mrf.mxu0
  %v238 = vpop.f32.mrf.mxu0
  %v239 = vadd.f32 0.0, %v238
  %v240 = vpop.f32.mrf.mxu0
  %241 = vmatprep.mubr.bf16.mxu0 0
  %242 = vmatmul.mubr.bf16.gmra.mxu0 %v131
  %v243 = vpop.f32.mrf.mxu0
  %v244 = vadd.f32 0.0, %v243
  %v245 = vpop.f32.mrf.mxu0
  %v246 = vpop.f32.mrf.mxu0
  %v247 = vadd.f32 0.0, %v246
  %v248 = vpop.f32.mrf.mxu0
  %249 = vmatprep.mubr.bf16.mxu0 0
  %250 = vmatmul.mubr.bf16.gmra.mxu0 %v132
  %v251 = vpop.f32.mrf.mxu0
  %v252 = vadd.f32 0.0, %v251
  %v253 = vpop.f32.mrf.mxu0
  %v254 = vpop.f32.mrf.mxu0
  %v255 = vadd.f32 0.0, %v254
  %v256 = vpop.f32.mrf.mxu0
  %257 = vmatprep.mubr.bf16.mxu0 0
  %258 = vmatmul.mubr.bf16.gmra.mxu0 %v133
  %v259 = vpop.f32.mrf.mxu0
  %v260 = vadd.f32 0.0, %v259
  %v261 = vpop.f32.mrf.mxu0
  %v262 = vpop.f32.mrf.mxu0
  %v263 = vadd.f32 0.0, %v262
  %v264 = vpop.f32.mrf.mxu0
  %265 = vmatprep.mubr.bf16.mxu0 0
  %266 = vmatmul.mubr.bf16.gmra.mxu0 %v134
  %v267 = vpop.f32.mrf.mxu0
  %v268 = vadd.f32 0.0, %v267
  %v269 = vpop.f32.mrf.mxu0
  %v270 = vpop.f32.mrf.mxu0
  %v271 = vadd.f32 0.0, %v270
  %v272 = vpop.f32.mrf.mxu0
  %273 = vmatprep.mubr.bf16.mxu0 0
  %274 = vmatmul.mubr.bf16.gmra.mxu0 %v135
  %v275 = vpop.f32.mrf.mxu0
  %v276 = vadd.f32 0.0, %v275
  %v277 = vpop.f32.mrf.mxu0
  %v278 = vpop.f32.mrf.mxu0
  %v279 = vadd.f32 0.0, %v278
  %v280 = vpop.f32.mrf.mxu0
  %281 = vmatprep.mubr.bf16.mxu0 0
  %282 = vmatmul.mubr.bf16.gmra.mxu0 %v136
  %v283 = vpop.f32.mrf.mxu0
  %v284 = vadd.f32 0.0, %v283
  %v285 = vpop.f32.mrf.mxu0
  %v286 = vpop.f32.mrf.mxu0
  %v287 = vadd.f32 0.0, %v286
  %v288 = vpop.f32.mrf.mxu0
  %289 = vdwg.mxu0
  %v290 = vadd.f32 %v65, %v228
  %v291 = vadd.f32 %v66, %v231
  %v292 = vadd.f32 %v67, %v236
  %v293 = vadd.f32 %v68, %v239
  %v294 = vadd.f32 %v69, %v244
  %v295 = vadd.f32 %v70, %v247
  %v296 = vadd.f32 %v71, %v252
  %v297 = vadd.f32 %v72, %v255
  %v298 = vadd.f32 %v73, %v260
  %v299 = vadd.f32 %v74, %v263
  %v300 = vadd.f32 %v75, %v268
  %v301 = vadd.f32 %v76, %v271
  %v302 = vadd.f32 %v77, %v276
  %v303 = vadd.f32 %v78, %v279
  %v304 = vadd.f32 %v79, %v284
  %v305 = vadd.f32 %v80, %v287
  %306 = vst [vmem:[#allocation2] sm:$0xff] %v290
  %307 = vst [vmem:[#allocation2 + $0x8] sm:$0xff] %v291
  %308 = vst [vmem:[#allocation2 + $0x10] sm:$0xff] %v292
  %309 = vst [vmem:[#allocation2 + $0x18] sm:$0xff] %v293
  %310 = vst [vmem:[#allocation2 + $0x20] sm:$0xff] %v294
  %311 = vst [vmem:[#allocation2 + $0x28] sm:$0xff] %v295
  %312 = vst [vmem:[#allocation2 + $0x30] sm:$0xff] %v296
  %313 = vst [vmem:[#allocation2 + $0x38] sm:$0xff] %v297
  %314 = vst [vmem:[#allocation2 + $0x40] sm:$0xff] %v298
  %315 = vst [vmem:[#allocation2 + $0x48] sm:$0xff] %v299
  %316 = vst [vmem:[#allocation2 + $0x50] sm:$0xff] %v300
  %317 = vst [vmem:[#allocation2 + $0x58] sm:$0xff] %v301
  %318 = vst [vmem:[#allocation2 + $0x60] sm:$0xff] %v302
  %319 = vst [vmem:[#allocation2 + $0x68] sm:$0xff] %v303
  %320 = vst [vmem:[#allocation2 + $0x70] sm:$0xff] %v304
  %321 = vst [vmem:[#allocation2 + $0x78] sm:$0xff] %v305
  // Predicated region
  $region30: #{graphsage_forward.3} parent=0 // pred_check
    %p322 = pneg %p24
  $region31: #{graphsage_forward.3} parent=0 // pred_check_branch
    %324 = sbr.rel (%p322) target = $region33
  $region32: #{graphsage_forward.3} parent=0 // pred_region
    %v325 = vld [vmem:[#allocation2] sm:$0xff]
    %v326 = vld [vmem:[#allocation2 + $0x8] sm:$0xff]
    %v327 = vld [vmem:[#allocation2 + $0x10] sm:$0xff]
    %v328 = vld [vmem:[#allocation2 + $0x18] sm:$0xff]
    %v329 = vld [vmem:[#allocation2 + $0x20] sm:$0xff]
    %v330 = vld [vmem:[#allocation2 + $0x28] sm:$0xff]
    %v331 = vld [vmem:[#allocation2 + $0x30] sm:$0xff]
    %v332 = vld [vmem:[#allocation2 + $0x38] sm:$0xff]
    %v333 = vld [vmem:[#allocation2 + $0x40] sm:$0xff]
    %v334 = vld [vmem:[#allocation2 + $0x48] sm:$0xff]
    %v335 = vld [vmem:[#allocation2 + $0x50] sm:$0xff]
    %v336 = vld [vmem:[#allocation2 + $0x58] sm:$0xff]
    %v337 = vld [vmem:[#allocation2 + $0x60] sm:$0xff]
    %v338 = vld [vmem:[#allocation2 + $0x68] sm:$0xff]
    %v339 = vld [vmem:[#allocation2 + $0x70] sm:$0xff]
    %v340 = vld [vmem:[#allocation2 + $0x78] sm:$0xff]
    %v341 = vld [vmem:[%s3] sm:$0xff]
    %v342 = vld [vmem:[%s3 + $0x8] sm:$0xff]
    %v343 = vld [vmem:[%s3 + $0x10] sm:$0xff]
    %v344 = vld [vmem:[%s3 + $0x18] sm:$0xff]
    %v345 = vld [vmem:[%s3 + $0x20] sm:$0xff]
    %v346 = vld [vmem:[%s3 + $0x28] sm:$0xff]
    %v347 = vld [vmem:[%s3 + $0x30] sm:$0xff]
    %v348 = vld [vmem:[%s3 + $0x38] sm:$0xff]
    %v349 = vld [vmem:[%s3 + $0x40] sm:$0xff]
    %v350 = vld [vmem:[%s3 + $0x48] sm:$0xff]
    %v351 = vld [vmem:[%s3 + $0x50] sm:$0xff]
    %v352 = vld [vmem:[%s3 + $0x58] sm:$0xff]
    %v353 = vld [vmem:[%s3 + $0x60] sm:$0xff]
    %v354 = vld [vmem:[%s3 + $0x68] sm:$0xff]
    %v355 = vld [vmem:[%s3 + $0x70] sm:$0xff]
    %v356 = vld [vmem:[%s3 + $0x78] sm:$0xff]
    %358 = vset.pattern.permute.xlu0 0
    %359 = vperm.xlu0 %358, %v341
    %v360 = vpop.permute.xlu0 %359
    %363 = vset.pattern.permute.xlu0 0
    %364 = vperm.xlu0 %363, %v342
    %v365 = vpop.permute.xlu0 %364
    %368 = vset.pattern.permute.xlu0 0
    %369 = vperm.xlu0 %368, %v343
    %v370 = vpop.permute.xlu0 %369
    %373 = vset.pattern.permute.xlu0 0
    %374 = vperm.xlu0 %373, %v344
    %v375 = vpop.permute.xlu0 %374
    %378 = vset.pattern.permute.xlu0 0
    %379 = vperm.xlu0 %378, %v345
    %v380 = vpop.permute.xlu0 %379
    %383 = vset.pattern.permute.xlu0 0
    %384 = vperm.xlu0 %383, %v346
    %v385 = vpop.permute.xlu0 %384
    %388 = vset.pattern.permute.xlu0 0
    %389 = vperm.xlu0 %388, %v347
    %v390 = vpop.permute.xlu0 %389
    %393 = vset.pattern.permute.xlu0 0
    %394 = vperm.xlu0 %393, %v348
    %v395 = vpop.permute.xlu0 %394
    %398 = vset.pattern.permute.xlu0 0
    %399 = vperm.xlu0 %398, %v349
    %v400 = vpop.permute.xlu0 %399
    %403 = vset.pattern.permute.xlu0 0
    %404 = vperm.xlu0 %403, %v350
    %v405 = vpop.permute.xlu0 %404
    %408 = vset.pattern.permute.xlu0 0
    %409 = vperm.xlu0 %408, %v351
    %v410 = vpop.permute.xlu0 %409
    %413 = vset.pattern.permute.xlu0 0
    %414 = vperm.xlu0 %413, %v352
    %v415 = vpop.permute.xlu0 %414
    %418 = vset.pattern.permute.xlu0 0
    %419 = vperm.xlu0 %418, %v353
    %v420 = vpop.permute.xlu0 %419
    %423 = vset.pattern.permute.xlu0 0
    %424 = vperm.xlu0 %423, %v354
    %v425 = vpop.permute.xlu0 %424
    %428 = vset.pattern.permute.xlu0 0
    %429 = vperm.xlu0 %428, %v355
    %v430 = vpop.permute.xlu0 %429
    %433 = vset.pattern.permute.xlu0 0
    %434 = vperm.xlu0 %433, %v356
    %v435 = vpop.permute.xlu0 %434
    %v437 = vmul.f32 %v325, %v360
    %v438 = vmul.f32 %v326, %v365
    %v439 = vmul.f32 %v327, %v370
    %v440 = vmul.f32 %v328, %v375
    %v441 = vmul.f32 %v329, %v380
    %v442 = vmul.f32 %v330, %v385
    %v443 = vmul.f32 %v331, %v390
    %v444 = vmul.f32 %v332, %v395
    %v445 = vmul.f32 %v333, %v400
    %v446 = vmul.f32 %v334, %v405
    %v447 = vmul.f32 %v335, %v410
    %v448 = vmul.f32 %v336, %v415
    %v449 = vmul.f32 %v337, %v420
    %v450 = vmul.f32 %v338, %v425
    %v451 = vmul.f32 %v339, %v430
    %v452 = vmul.f32 %v340, %v435
    %v453 = vpack.c.bf16 %v438, %v437
    %v454 = vpack.c.bf16 %v440, %v439
    %v455 = vpack.c.bf16 %v442, %v441
    %v456 = vpack.c.bf16 %v444, %v443
    %v457 = vpack.c.bf16 %v446, %v445
    %v458 = vpack.c.bf16 %v448, %v447
    %v459 = vpack.c.bf16 %v450, %v449
    %v460 = vpack.c.bf16 %v452, %v451
    %v461 = vld [vmem:[%s2] sm:$0xf]
    %v462 = vld [vmem:[%s2 + $0x4] sm:$0xf]
    %v463 = vld [vmem:[%s2 + $0x8] sm:$0xf]
    %v464 = vld [vmem:[%s2 + $0xc] sm:$0xf]
    %v465 = vld [vmem:[%s2 + $0x10] sm:$0xf]
    %v466 = vld [vmem:[%s2 + $0x14] sm:$0xf]
    %v467 = vld [vmem:[%s2 + $0x18] sm:$0xf]
    %v468 = vld [vmem:[%s2 + $0x1c] sm:$0xf]
    %v469 = vld [vmem:[%s2 + $0x20] sm:$0xf]
    %v470 = vld [vmem:[%s2 + $0x24] sm:$0xf]
    %v471 = vld [vmem:[%s2 + $0x28] sm:$0xf]
    %v472 = vld [vmem:[%s2 + $0x2c] sm:$0xf]
    %v473 = vld [vmem:[%s2 + $0x30] sm:$0xf]
    %v474 = vld [vmem:[%s2 + $0x34] sm:$0xf]
    %v475 = vld [vmem:[%s2 + $0x38] sm:$0xf]
    %v476 = vld [vmem:[%s2 + $0x3c] sm:$0xf]
    %v493 = vunpack.c.l.b16 %v461
    %v494 = vunpack.c.l.b16 %v462
    %v495 = vunpack.c.l.b16 %v463
    %v496 = vunpack.c.l.b16 %v464
    %v497 = vunpack.c.l.b16 %v465
    %v498 = vunpack.c.l.b16 %v466
    %v499 = vunpack.c.l.b16 %v467
    %v500 = vunpack.c.l.b16 %v468
    %v501 = vunpack.c.l.b16 %v469
    %v502 = vunpack.c.l.b16 %v470
    %v503 = vunpack.c.l.b16 %v471
    %v504 = vunpack.c.l.b16 %v472
    %v505 = vunpack.c.l.b16 %v473
    %v506 = vunpack.c.l.b16 %v474
    %v507 = vunpack.c.l.b16 %v475
    %v508 = vunpack.c.l.b16 %v476
    %v509 = vpack.c.b16 %v494, %v493
    %v510 = vpack.c.b16 %v496, %v495
    %v511 = vpack.c.b16 %v498, %v497
    %v512 = vpack.c.b16 %v500, %v499
    %v513 = vpack.c.b16 %v502, %v501
    %v514 = vpack.c.b16 %v504, %v503
    %v515 = vpack.c.b16 %v506, %v505
    %v516 = vpack.c.b16 %v508, %v507
    %v525 = vld [vmem:[%s4] sm:$0xf]
    %v526 = vld [vmem:[%s4 + $0x4] sm:$0xf]
    %v527 = vld [vmem:[%s4 + $0x8] sm:$0xf]
    %v528 = vld [vmem:[%s4 + $0xc] sm:$0xf]
    %v529 = vld [vmem:[%s4 + $0x10] sm:$0xf]
    %v530 = vld [vmem:[%s4 + $0x14] sm:$0xf]
    %v531 = vld [vmem:[%s4 + $0x18] sm:$0xf]
    %v532 = vld [vmem:[%s4 + $0x1c] sm:$0xf]
    %v533 = vld [vmem:[%s4 + $0x20] sm:$0xf]
    %v534 = vld [vmem:[%s4 + $0x24] sm:$0xf]
    %v535 = vld [vmem:[%s4 + $0x28] sm:$0xf]
    %v536 = vld [vmem:[%s4 + $0x2c] sm:$0xf]
    %v537 = vld [vmem:[%s4 + $0x30] sm:$0xf]
    %v538 = vld [vmem:[%s4 + $0x34] sm:$0xf]
    %v539 = vld [vmem:[%s4 + $0x38] sm:$0xf]
    %v540 = vld [vmem:[%s4 + $0x3c] sm:$0xf]
    %v541 = vld [vmem:[%s4 + $0x40] sm:$0xf]
    %v542 = vld [vmem:[%s4 + $0x44] sm:$0xf]
    %v543 = vld [vmem:[%s4 + $0x48] sm:$0xf]
    %v544 = vld [vmem:[%s4 + $0x4c] sm:$0xf]
    %v545 = vld [vmem:[%s4 + $0x50] sm:$0xf]
    %v546 = vld [vmem:[%s4 + $0x54] sm:$0xf]
    %v547 = vld [vmem:[%s4 + $0x58] sm:$0xf]
    %v548 = vld [vmem:[%s4 + $0x5c] sm:$0xf]
    %v549 = vld [vmem:[%s4 + $0x60] sm:$0xf]
    %v550 = vld [vmem:[%s4 + $0x64] sm:$0xf]
    %v551 = vld [vmem:[%s4 + $0x68] sm:$0xf]
    %v552 = vld [vmem:[%s4 + $0x6c] sm:$0xf]
    %v553 = vld [vmem:[%s4 + $0x70] sm:$0xf]
    %v554 = vld [vmem:[%s4 + $0x74] sm:$0xf]
    %v555 = vld [vmem:[%s4 + $0x78] sm:$0xf]
    %v556 = vld [vmem:[%s4 + $0x7c] sm:$0xf]
    %v557 = vld [vmem:[%s5] sm:$0x1]
    %v559 = vlaneseq
    %v560 = vshrl.u32 %v559, 7
    %v561 = vsub.s32 0, %v560
    %v562 = vrot.slane %v557, %v561
    %v596 = vunpack.c.l.b16 %v525
    %v597 = vunpack.c.l.b16 %v526
    %v598 = vunpack.c.l.b16 %v527
    %v599 = vunpack.c.l.b16 %v528
    %v600 = vunpack.c.l.b16 %v529
    %v601 = vunpack.c.l.b16 %v530
    %v602 = vunpack.c.l.b16 %v531
    %v603 = vunpack.c.l.b16 %v532
    %v604 = vunpack.c.l.b16 %v533
    %v605 = vunpack.c.l.b16 %v534
    %v606 = vunpack.c.l.b16 %v535
    %v607 = vunpack.c.l.b16 %v536
    %v608 = vunpack.c.l.b16 %v537
    %v609 = vunpack.c.l.b16 %v538
    %v610 = vunpack.c.l.b16 %v539
    %v611 = vunpack.c.l.b16 %v540
    %v612 = vunpack.c.l.b16 %v541
    %v613 = vunpack.c.l.b16 %v542
    %v614 = vunpack.c.l.b16 %v543
    %v615 = vunpack.c.l.b16 %v544
    %v616 = vunpack.c.l.b16 %v545
    %v617 = vunpack.c.l.b16 %v546
    %v618 = vunpack.c.l.b16 %v547
    %v619 = vunpack.c.l.b16 %v548
    %v620 = vunpack.c.l.b16 %v549
    %v621 = vunpack.c.l.b16 %v550
    %v622 = vunpack.c.l.b16 %v551
    %v623 = vunpack.c.l.b16 %v552
    %v624 = vunpack.c.l.b16 %v553
    %v625 = vunpack.c.l.b16 %v554
    %v626 = vunpack.c.l.b16 %v555
    %v627 = vunpack.c.l.b16 %v556
    %v628 = vpack.c.b16 %v597, %v596
    %v629 = vpack.c.b16 %v599, %v598
    %v630 = vpack.c.b16 %v601, %v600
    %v631 = vpack.c.b16 %v603, %v602
    %v632 = vpack.c.b16 %v605, %v604
    %v633 = vpack.c.b16 %v607, %v606
    %v634 = vpack.c.b16 %v609, %v608
    %v635 = vpack.c.b16 %v611, %v610
    %v636 = vpack.c.b16 %v613, %v612
    %v637 = vpack.c.b16 %v615, %v614
    %v638 = vpack.c.b16 %v617, %v616
    %v639 = vpack.c.b16 %v619, %v618
    %v640 = vpack.c.b16 %v621, %v620
    %v641 = vpack.c.b16 %v623, %v622
    %v642 = vpack.c.b16 %v625, %v624
    %v643 = vpack.c.b16 %v627, %v626
    %660 = vmatprep.subr.bf16.mxu0 0
    %661 = vmatpush1.bf16.msra.mxu0 %v635
    %662 = vmatprep.subr.bf16.mxu0 0
    %663 = vmatpush1.bf16.msra.mxu0 %v634
    %664 = vmatprep.subr.bf16.mxu0 0
    %665 = vmatpush1.bf16.msra.mxu0 %v633
    %666 = vmatprep.subr.bf16.mxu0 0
    %667 = vmatpush1.bf16.msra.mxu0 %v632
    %668 = vmatprep.subr.bf16.mxu0 0
    %669 = vmatpush1.bf16.msra.mxu0 %v631
    %670 = vmatprep.subr.bf16.mxu0 0
    %671 = vmatpush1.bf16.msra.mxu0 %v630
    %672 = vmatprep.subr.bf16.mxu0 0
    %673 = vmatpush1.bf16.msra.mxu0 %v629
    %674 = vmatprep.subr.bf16.mxu0 0
    %675 = vmatpush1.bf16.msra.mxu0 %v628
    %676 = vmatprep.subr.bf16.mxu0 0
    %677 = vmatpush2.bf16.msra.mxu0 %v643
    %678 = vmatprep.subr.bf16.mxu0 0
    %679 = vmatpush2.bf16.msra.mxu0 %v642
    %680 = vmatprep.subr.bf16.mxu0 0
    %681 = vmatpush2.bf16.msra.mxu0 %v641
    %682 = vmatprep.subr.bf16.mxu0 0
    %683 = vmatpush2.bf16.msra.mxu0 %v640
    %684 = vmatprep.subr.bf16.mxu0 0
    %685 = vmatpush2.bf16.msra.mxu0 %v639
    %686 = vmatprep.subr.bf16.mxu0 0
    %687 = vmatpush2.bf16.msra.mxu0 %v638
    %688 = vmatprep.subr.bf16.mxu0 0
    %689 = vmatpush2.bf16.msra.mxu0 %v637
    %690 = vmatprep.subr.bf16.mxu0 0
    %691 = vmatpush2.bf16.msra.mxu0 %v636
    %692 = vmatprep.mubr.bf16.mxu0 %v509
    %693 = vmatmul.mubr.bf16.gmra.mxu0 %v453
    %v694 = vpop.f32.mrf.mxu0
    %v695 = vadd.f32 %v562, %v694
    %v696 = vpop.f32.mrf.mxu0
    %v697 = vpop.f32.mrf.mxu0
    %v698 = vadd.f32 %v562, %v697
    %v699 = vpop.f32.mrf.mxu0
    %700 = vmatprep.mubr.bf16.mxu0 %v510
    %701 = vmatmul.mubr.bf16.gmra.mxu0 %v454
    %v702 = vpop.f32.mrf.mxu0
    %v703 = vadd.f32 %v562, %v702
    %v704 = vpop.f32.mrf.mxu0
    %v705 = vpop.f32.mrf.mxu0
    %v706 = vadd.f32 %v562, %v705
    %v707 = vpop.f32.mrf.mxu0
    %708 = vmatprep.mubr.bf16.mxu0 %v511
    %709 = vmatmul.mubr.bf16.gmra.mxu0 %v455
    %v710 = vpop.f32.mrf.mxu0
    %v711 = vadd.f32 %v562, %v710
    %v712 = vpop.f32.mrf.mxu0
    %v713 = vpop.f32.mrf.mxu0
    %v714 = vadd.f32 %v562, %v713
    %v715 = vpop.f32.mrf.mxu0
    %716 = vmatprep.mubr.bf16.mxu0 %v512
    %717 = vmatmul.mubr.bf16.gmra.mxu0 %v456
    %v718 = vpop.f32.mrf.mxu0
    %v719 = vadd.f32 %v562, %v718
    %v720 = vpop.f32.mrf.mxu0
    %v721 = vpop.f32.mrf.mxu0
    %v722 = vadd.f32 %v562, %v721
    %v723 = vpop.f32.mrf.mxu0
    %724 = vmatprep.mubr.bf16.mxu0 %v513
    %725 = vmatmul.mubr.bf16.gmra.mxu0 %v457
    %v726 = vpop.f32.mrf.mxu0
    %v727 = vadd.f32 %v562, %v726
    %v728 = vpop.f32.mrf.mxu0
    %v729 = vpop.f32.mrf.mxu0
    %v730 = vadd.f32 %v562, %v729
    %v731 = vpop.f32.mrf.mxu0
    %732 = vmatprep.mubr.bf16.mxu0 %v514
    %733 = vmatmul.mubr.bf16.gmra.mxu0 %v458
    %v734 = vpop.f32.mrf.mxu0
    %v735 = vadd.f32 %v562, %v734
    %v736 = vpop.f32.mrf.mxu0
    %v737 = vpop.f32.mrf.mxu0
    %v738 = vadd.f32 %v562, %v737
    %v739 = vpop.f32.mrf.mxu0
    %740 = vmatprep.mubr.bf16.mxu0 %v515
    %741 = vmatmul.mubr.bf16.gmra.mxu0 %v459
    %v742 = vpop.f32.mrf.mxu0
    %v743 = vadd.f32 %v562, %v742
    %v744 = vpop.f32.mrf.mxu0
    %v745 = vpop.f32.mrf.mxu0
    %v746 = vadd.f32 %v562, %v745
    %v747 = vpop.f32.mrf.mxu0
    %748 = vmatprep.mubr.bf16.mxu0 %v516
    %749 = vmatmul.mubr.bf16.gmra.mxu0 %v460
    %v750 = vpop.f32.mrf.mxu0
    %v751 = vadd.f32 %v562, %v750
    %v752 = vpop.f32.mrf.mxu0
    %v753 = vpop.f32.mrf.mxu0
    %v754 = vadd.f32 %v562, %v753
    %v755 = vpop.f32.mrf.mxu0
    %756 = vdwg.mxu0
    %v757 = vlaneseq
    %v758 = vand.u32 %v757, 127
    %vm759 = vcmp.lt.s32.totalorder %v758, 8
    %v760 = vsel %vm759, %v695, -1e+30
    %v761 = vsel %vm759, %v698, -1e+30
    %v762 = vsel %vm759, %v703, -1e+30
    %v763 = vsel %vm759, %v706, -1e+30
    %v764 = vsel %vm759, %v711, -1e+30
    %v765 = vsel %vm759, %v714, -1e+30
    %v766 = vsel %vm759, %v719, -1e+30
    %v767 = vsel %vm759, %v722, -1e+30
    %v768 = vsel %vm759, %v727, -1e+30
    %v769 = vsel %vm759, %v730, -1e+30
    %v770 = vsel %vm759, %v735, -1e+30
    %v771 = vsel %vm759, %v738, -1e+30
    %v772 = vsel %vm759, %v743, -1e+30
    %v773 = vsel %vm759, %v746, -1e+30
    %v774 = vsel %vm759, %v751, -1e+30
    %v775 = vsel %vm759, %v754, -1e+30
    %776 = vmax.xlane.f32.xlu0 %v760
    %v777 = vpop.xlane.xlu0 %776
    %778 = vmax.xlane.f32.xlu0 %v761
    %v779 = vpop.xlane.xlu0 %778
    %780 = vmax.xlane.f32.xlu0 %v762
    %v781 = vpop.xlane.xlu0 %780
    %782 = vmax.xlane.f32.xlu0 %v763
    %v783 = vpop.xlane.xlu0 %782
    %784 = vmax.xlane.f32.xlu0 %v764
    %v785 = vpop.xlane.xlu0 %784
    %786 = vmax.xlane.f32.xlu0 %v765
    %v787 = vpop.xlane.xlu0 %786
    %788 = vmax.xlane.f32.xlu0 %v766
    %v789 = vpop.xlane.xlu0 %788
    %790 = vmax.xlane.f32.xlu0 %v767
    %v791 = vpop.xlane.xlu0 %790
    %792 = vmax.xlane.f32.xlu0 %v768
    %v793 = vpop.xlane.xlu0 %792
    %794 = vmax.xlane.f32.xlu0 %v769
    %v795 = vpop.xlane.xlu0 %794
    %796 = vmax.xlane.f32.xlu0 %v770
    %v797 = vpop.xlane.xlu0 %796
    %798 = vmax.xlane.f32.xlu0 %v771
    %v799 = vpop.xlane.xlu0 %798
    %800 = vmax.xlane.f32.xlu0 %v772
    %v801 = vpop.xlane.xlu0 %800
    %802 = vmax.xlane.f32.xlu0 %v773
    %v803 = vpop.xlane.xlu0 %802
    %804 = vmax.xlane.f32.xlu0 %v774
    %v805 = vpop.xlane.xlu0 %804
    %806 = vmax.xlane.f32.xlu0 %v775
    %v807 = vpop.xlane.xlu0 %806
    %v808 = vsub.f32 %v760, %v777
    %v809 = vsub.f32 %v761, %v779
    %v810 = vsub.f32 %v762, %v781
    %v811 = vsub.f32 %v763, %v783
    %v812 = vsub.f32 %v764, %v785
    %v813 = vsub.f32 %v765, %v787
    %v814 = vsub.f32 %v766, %v789
    %v815 = vsub.f32 %v767, %v791
    %v816 = vsub.f32 %v768, %v793
    %v817 = vsub.f32 %v769, %v795
    %v818 = vsub.f32 %v770, %v797
    %v819 = vsub.f32 %v771, %v799
    %v820 = vsub.f32 %v772, %v801
    %v821 = vsub.f32 %v773, %v803
    %v822 = vsub.f32 %v774, %v805
    %v823 = vsub.f32 %v775, %v807
    %v824 = vmul.f32 %v808, 1.442695
    %v825 = vpow.pop %v824
    %v826 = vmul.f32 %v809, 1.442695
    %v827 = vpow.pop %v826
    %v828 = vmul.f32 %v810, 1.442695
    %v829 = vpow.pop %v828
    %v830 = vmul.f32 %v811, 1.442695
    %v831 = vpow.pop %v830
    %v832 = vmul.f32 %v812, 1.442695
    %v833 = vpow.pop %v832
    %v834 = vmul.f32 %v813, 1.442695
    %v835 = vpow.pop %v834
    %v836 = vmul.f32 %v814, 1.442695
    %v837 = vpow.pop %v836
    %v838 = vmul.f32 %v815, 1.442695
    %v839 = vpow.pop %v838
    %v840 = vmul.f32 %v816, 1.442695
    %v841 = vpow.pop %v840
    %v842 = vmul.f32 %v817, 1.442695
    %v843 = vpow.pop %v842
    %v844 = vmul.f32 %v818, 1.442695
    %v845 = vpow.pop %v844
    %v846 = vmul.f32 %v819, 1.442695
    %v847 = vpow.pop %v846
    %v848 = vmul.f32 %v820, 1.442695
    %v849 = vpow.pop %v848
    %v850 = vmul.f32 %v821, 1.442695
    %v851 = vpow.pop %v850
    %v852 = vmul.f32 %v822, 1.442695
    %v853 = vpow.pop %v852
    %v854 = vmul.f32 %v823, 1.442695
    %v855 = vpow.pop %v854
    %856 = vadd.xlane.f32.xlu0 %v825
    %v857 = vpop.xlane.xlu0 %856
    %858 = vadd.xlane.f32.xlu0 %v827
    %v859 = vpop.xlane.xlu0 %858
    %860 = vadd.xlane.f32.xlu0 %v829
    %v861 = vpop.xlane.xlu0 %860
    %862 = vadd.xlane.f32.xlu0 %v831
    %v863 = vpop.xlane.xlu0 %862
    %864 = vadd.xlane.f32.xlu0 %v833
    %v865 = vpop.xlane.xlu0 %864
    %866 = vadd.xlane.f32.xlu0 %v835
    %v867 = vpop.xlane.xlu0 %866
    %868 = vadd.xlane.f32.xlu0 %v837
    %v869 = vpop.xlane.xlu0 %868
    %870 = vadd.xlane.f32.xlu0 %v839
    %v871 = vpop.xlane.xlu0 %870
    %872 = vadd.xlane.f32.xlu0 %v841
    %v873 = vpop.xlane.xlu0 %872
    %874 = vadd.xlane.f32.xlu0 %v843
    %v875 = vpop.xlane.xlu0 %874
    %876 = vadd.xlane.f32.xlu0 %v845
    %v877 = vpop.xlane.xlu0 %876
    %878 = vadd.xlane.f32.xlu0 %v847
    %v879 = vpop.xlane.xlu0 %878
    %880 = vadd.xlane.f32.xlu0 %v849
    %v881 = vpop.xlane.xlu0 %880
    %882 = vadd.xlane.f32.xlu0 %v851
    %v883 = vpop.xlane.xlu0 %882
    %884 = vadd.xlane.f32.xlu0 %v853
    %v885 = vpop.xlane.xlu0 %884
    %886 = vadd.xlane.f32.xlu0 %v855
    %v887 = vpop.xlane.xlu0 %886
    %v888 = vlog2.pop %v857
    %v889 = vmul.f32 %v888, 0.6931472
    %v890 = vlog2.pop %v859
    %v891 = vmul.f32 %v890, 0.6931472
    %v892 = vlog2.pop %v861
    %v893 = vmul.f32 %v892, 0.6931472
    %v894 = vlog2.pop %v863
    %v895 = vmul.f32 %v894, 0.6931472
    %v896 = vlog2.pop %v865
    %v897 = vmul.f32 %v896, 0.6931472
    %v898 = vlog2.pop %v867
    %v899 = vmul.f32 %v898, 0.6931472
    %v900 = vlog2.pop %v869
    %v901 = vmul.f32 %v900, 0.6931472
    %v902 = vlog2.pop %v871
    %v903 = vmul.f32 %v902, 0.6931472
    %v904 = vlog2.pop %v873
    %v905 = vmul.f32 %v904, 0.6931472
    %v906 = vlog2.pop %v875
    %v907 = vmul.f32 %v906, 0.6931472
    %v908 = vlog2.pop %v877
    %v909 = vmul.f32 %v908, 0.6931472
    %v910 = vlog2.pop %v879
    %v911 = vmul.f32 %v910, 0.6931472
    %v912 = vlog2.pop %v881
    %v913 = vmul.f32 %v912, 0.6931472
    %v914 = vlog2.pop %v883
    %v915 = vmul.f32 %v914, 0.6931472
    %v916 = vlog2.pop %v885
    %v917 = vmul.f32 %v916, 0.6931472
    %v918 = vlog2.pop %v887
    %v919 = vmul.f32 %v918, 0.6931472
    %v920 = vsub.f32 %v808, %v889
    %v921 = vsub.f32 %v809, %v891
    %v922 = vsub.f32 %v810, %v893
    %v923 = vsub.f32 %v811, %v895
    %v924 = vsub.f32 %v812, %v897
    %v925 = vsub.f32 %v813, %v899
    %v926 = vsub.f32 %v814, %v901
    %v927 = vsub.f32 %v815, %v903
    %v928 = vsub.f32 %v816, %v905
    %v929 = vsub.f32 %v817, %v907
    %v930 = vsub.f32 %v818, %v909
    %v931 = vsub.f32 %v819, %v911
    %v932 = vsub.f32 %v820, %v913
    %v933 = vsub.f32 %v821, %v915
    %v934 = vsub.f32 %v822, %v917
    %v935 = vsub.f32 %v823, %v919
    %936 = vst [vmem:[%s6] sm:$0xff] %v920
    %937 = vst [vmem:[%s6 + $0x8] sm:$0xff] %v921
    %938 = vst [vmem:[%s6 + $0x10] sm:$0xff] %v922
    %939 = vst [vmem:[%s6 + $0x18] sm:$0xff] %v923
    %940 = vst [vmem:[%s6 + $0x20] sm:$0xff] %v924
    %941 = vst [vmem:[%s6 + $0x28] sm:$0xff] %v925
    %942 = vst [vmem:[%s6 + $0x30] sm:$0xff] %v926
    %943 = vst [vmem:[%s6 + $0x38] sm:$0xff] %v927
    %944 = vst [vmem:[%s6 + $0x40] sm:$0xff] %v928
    %945 = vst [vmem:[%s6 + $0x48] sm:$0xff] %v929
    %946 = vst [vmem:[%s6 + $0x50] sm:$0xff] %v930
    %947 = vst [vmem:[%s6 + $0x58] sm:$0xff] %v931
    %948 = vst [vmem:[%s6 + $0x60] sm:$0xff] %v932
    %949 = vst [vmem:[%s6 + $0x68] sm:$0xff] %v933
    %950 = vst [vmem:[%s6 + $0x70] sm:$0xff] %v934
    %951 = vst [vmem:[%s6 + $0x78] sm:$0xff] %v935
  $region33: #{graphsage_forward.3} parent=0 // pred_fallthru
    _
  // Predicated region
  $region34: #{graphsage_forward.3} parent=0 // pred_check
    _
  $region35: #{graphsage_forward.3} parent=0 // pred_check_branch
    %953 = sbr.rel (0) target = $region37
  $region36: #{graphsage_forward.3} parent=0 // pred_region
    _
  $region37: #{graphsage_forward.3} parent=0 // pred_fallthru
    _
  // Predicated region
  $region38: #{graphsage_forward.3} parent=0 // pred_check
    _
  $region39: #{graphsage_forward.3} parent=0 // pred_check_branch
    %955 = sbr.rel (0) target = $region41
  $region40: #{graphsage_forward.3} parent=0 // pred_region
    _
  $region41: #{graphsage_forward.3} parent=0 // pred_fallthru
    _

</llo_original>
